<compile_context>
chip_gen: v7x
topology: tpu7x:2x2x1
jax: 0.10.0
libtpu: 0.0.40
codegen_flags: <defaults>
</compile_context>

<pallas_src>
import math

import jax
import jax.numpy as jnp
import numpy as np
from jax.experimental import pallas as pl
from jax.experimental.pallas import tpu as pltpu

# ----- line-search hyperparameters (mirror the torch module __init__) -------
MAX_STEP_SIZE = 8.0
ZOOM_ITERATIONS = 6
SUFFICIENT_DECREASE = 1e-4   # c1
CURVATURE = 0.9              # c2
WIDEN_ITERATIONS = int(math.ceil(math.log2(MAX_STEP_SIZE))) + 1   # = 4

SUB = 8   # sublanes per packed row-group (full f32 vreg height)


# ============================================================================
# Kernel: the whole widening + zoom mask chain on (SUB, tile) slabs.
# Input block  (3*SUB, tile): rows [0:8)=base_error, [8:16)=base_gradient,
#                             rows [16:24)=curvature  (= d^T A d).
# Output block (2*SUB, tile): rows [0:8)=upper_alpha, [8:16)=ux_alpha, where
# ux_alpha parameterizes the returned upper candidate function's parameters
# (it can differ from upper_alpha for rows still widening at exit, exactly as
# in the torch module).
# ============================================================================
def _line_search_kernel(coef_ref, out_ref):
    coefs = coef_ref[...]
    be = coefs[0:SUB]              # base error
    bg = coefs[SUB:2 * SUB]        # base directional gradient  g0 . d
    cv = coefs[2 * SUB:3 * SUB]    # curvature along d          d^T A d
    dt = be.dtype

    c1 = jnp.asarray(SUFFICIENT_DECREASE, dt)
    c2 = jnp.asarray(CURVATURE, dt)
    max_step = jnp.asarray(MAX_STEP_SIZE, dt)

    def err_at(alpha):
        return be + alpha * bg + 0.5 * (alpha * alpha) * cv

    def gdot_at(alpha):
        return bg + alpha * cv

    zero = jnp.zeros_like(be)
    one = jnp.ones_like(be)

    lower_alpha = zero
    upper_alpha = one
    lx_alpha = zero            # alpha of the lower candidate's parameters
    ux_alpha = zero            # alpha of the upper candidate's parameters
    prev_error = be
    widening = jnp.ones(be.shape, jnp.bool_)
    zooming = jnp.zeros(be.shape, jnp.bool_)

    # -------------------- widening loop (alg. 3.5) --------------------------
    for idx in range(WIDEN_ITERATIONS):
        ux_alpha = jnp.where(widening, upper_alpha, ux_alpha)
        error = err_at(ux_alpha)
        g_dot = gdot_at(ux_alpha)

        inc = error > be + c1 * upper_alpha * bg
        if idx > 0:
            inc = jnp.logical_or(inc, error >= prev_error)
        increasing = jnp.logical_and(widening, inc)
        zooming = jnp.logical_or(zooming, increasing)
        widening = jnp.logical_and(widening, jnp.logical_not(increasing))

        met = jnp.abs(g_dot) <= (-c2) * bg
        widening = jnp.logical_and(widening, jnp.logical_not(met))

        swapping = jnp.logical_and(widening, g_dot >= 0.0)
        zooming = jnp.logical_or(zooming, swapping)
        upper_alpha, lower_alpha = (jnp.where(swapping, lower_alpha, upper_alpha),
                                    jnp.where(swapping, upper_alpha, lower_alpha))
        ux_alpha, lx_alpha = (jnp.where(swapping, lx_alpha, ux_alpha),
                              jnp.where(swapping, ux_alpha, lx_alpha))
        widening = jnp.logical_and(widening, jnp.logical_not(swapping))

        lower_alpha = jnp.where(widening, upper_alpha, lower_alpha)
        upper_alpha = jnp.where(widening,
                                jnp.minimum(2.0 * upper_alpha, max_step),
                                upper_alpha)
        lx_alpha = jnp.where(widening, ux_alpha, lx_alpha)
        prev_error = error

    # lower_error is fixed at zoom entry, exactly as in the torch module.
    lower_error = err_at(lx_alpha)

    # -------------------- zoom loop (alg. 3.6) ------------------------------
    for _ in range(ZOOM_ITERATIONS):
        lower_g = gdot_at(lx_alpha)
        upper_g = gdot_at(ux_alpha)
        grad_diff = upper_g - lower_g
        denom = grad_diff + jnp.asarray(1e-8, dt)
        # Guard an exactly-zero denominator; any rejected secant step falls
        # back to bisection below, matching the module for non-degenerate input.
        safe_denom = jnp.where(denom == 0.0, jnp.asarray(1e-12, dt), denom)
        cand_alpha = lower_alpha - lower_g * (upper_alpha - lower_alpha) / safe_denom

        non_linear = jnp.logical_or(
            grad_diff == 0.0,
            jnp.logical_or(cand_alpha < jnp.minimum(lower_alpha, upper_alpha),
                           cand_alpha > jnp.maximum(lower_alpha, upper_alpha)))
        cand_alpha = jnp.where(non_linear,
                               0.5 * (lower_alpha + upper_alpha), cand_alpha)
        cand_alpha = jnp.where(zooming, cand_alpha, zero)

        error = err_at(cand_alpha)
        g_dot = gdot_at(cand_alpha)

        inc = error > be + c1 * cand_alpha * bg
        increasing = jnp.logical_and(
            zooming, jnp.logical_or(error >= lower_error, inc))
        upper_alpha = jnp.where(increasing, cand_alpha, upper_alpha)
        ux_alpha = jnp.where(increasing, cand_alpha, ux_alpha)

        nie = jnp.logical_and(zooming, jnp.logical_not(increasing))
        met = jnp.logical_and(nie, jnp.abs(g_dot) <= (-c2) * bg)
        upper_alpha = jnp.where(met, cand_alpha, upper_alpha)
        ux_alpha = jnp.where(met, cand_alpha, ux_alpha)
        zooming = jnp.logical_and(zooming, jnp.logical_not(met))

        reversed_g = (g_dot * (upper_alpha - lower_alpha)) >= 0.0
        swapping = jnp.logical_and(nie, jnp.logical_and(reversed_g, zooming))
        upper_alpha, lower_alpha = (jnp.where(swapping, lower_alpha, upper_alpha),
                                    jnp.where(swapping, upper_alpha, lower_alpha))
        ux_alpha, lx_alpha = (jnp.where(swapping, lx_alpha, ux_alpha),
                              jnp.where(swapping, ux_alpha, lx_alpha))

        nie2 = jnp.logical_and(nie, zooming)
        lower_alpha = jnp.where(nie2, cand_alpha, lower_alpha)
        lx_alpha = jnp.where(nie2, cand_alpha, lx_alpha)

    out_ref[...] = jnp.concatenate([upper_alpha, ux_alpha], axis=0)


# ------------------------------ wrapper --------------------------------------
def line_search_strong_wolfe(x0, search_direction, quad_a, quad_c, tile_lanes=None):
    """x0, search_direction, quad_a, quad_c: (B, E, D).

    Returns (upper_params (B,E,D), step (B,E,D), upper_alpha (B,E)):
    the parameters of the returned 'upper_candidate_function' and the step
    tensor upper_alpha[:, :, None] * search_direction of the torch module.
    """
    B, E, D = x0.shape
    n = B * E
    dt = x0.dtype

    # Closed-form quadratic coefficients, computed in the natural (B,E,D)
    # layout (single fused memory-bound XLA pass; no transposes, no (N,D)
    # traffic through the kernel).
    diff0 = x0 - quad_c
    g0 = quad_a * diff0
    base_error = (0.5 * jnp.sum(g0 * diff0, axis=-1)).reshape(n)
    base_gradient = jnp.sum(g0 * search_direction, axis=-1).reshape(n)
    curvature = jnp.sum(quad_a * search_direction * search_direction,
                        axis=-1).reshape(n)

    # Sublane-dense packing: each (n,) row becomes an (8, cols) slab.
    cols_raw = -(-n // SUB)
    if tile_lanes is None:
        if cols_raw <= 128:
            tc = 128
        else:
            # Aim for >= 2 grid steps so both v7x TensorCores get work,
            # while keeping tiles lane-dense multiples of 128.
            half = -(-cols_raw // 2)
            tc = min(2048, ((half + 127) // 128) * 128)
    else:
        tc = max(128, (int(tile_lanes) // 128) * 128)
    cols = ((cols_raw + tc - 1) // tc) * tc
    n_pad = SUB * cols

    def pack(v):
        # Zero padding is benign: be=bg=cv=0 meets the curvature condition at
        # widening iteration 0, so padded columns settle immediately.
        return jnp.pad(v, (0, n_pad - n)).reshape(SUB, cols)

    coeffs = jnp.concatenate(
        [pack(base_error), pack(base_gradient), pack(curvature)], axis=0)

    out = pl.pallas_call(
        _line_search_kernel,
        out_shape=jax.ShapeDtypeStruct((2 * SUB, cols), dt),
        grid=(cols // tc,),
        in_specs=[pl.BlockSpec((3 * SUB, tc), lambda i: (0, i))],
        out_specs=pl.BlockSpec((2 * SUB, tc), lambda i: (0, i)),
        compiler_params=pltpu.CompilerParams(
            dimension_semantics=("parallel",)),
    )(coeffs)

    upper_alpha = out[0:SUB].reshape(n_pad)[:n].reshape(B, E)
    ux_alpha = out[SUB:2 * SUB].reshape(n_pad)[:n].reshape(B, E)

    # Reconstruct the (B, E, D) outputs with fused XLA outside the kernel.
    step = upper_alpha[..., None] * search_direction
    upper_params = x0 + ux_alpha[..., None] * search_direction
    return upper_params, step, upper_alpha


# ============================================================================
# Pure-JAX reference: faithful translation of the torch module, carrying full
# candidate parameter arrays and evaluating error/gradient explicitly from x.
# ============================================================================
def _err_grad_ref(x, quad_a, quad_c):
    diff = x - quad_c
    err = 0.5 * jnp.sum(quad_a * diff * diff, axis=-1, keepdims=True)
    grad = quad_a * diff
    return err, grad


def _line_search_math_ref(x0, d, quad_a, quad_c):
    dtype = x0.dtype
    n = x0.shape[0]
    c1 = jnp.asarray(SUFFICIENT_DECREASE, dtype)
    c2 = jnp.asarray(CURVATURE, dtype)
    max_step = jnp.asarray(MAX_STEP_SIZE, dtype)

    base_error, base_grad = _err_grad_ref(x0, quad_a, quad_c)
    base_gradient = jnp.sum(base_grad * d, axis=-1, keepdims=True)

    lower_alpha = jnp.zeros((n, 1), dtype)
    upper_alpha = jnp.ones((n, 1), dtype)
    lower_x = x0
    upper_x = x0
    prev_error = base_error
    widening = jnp.ones((n, 1), jnp.bool_)
    zooming = jnp.zeros((n, 1), jnp.bool_)

    for idx in range(WIDEN_ITERATIONS):
        cand_x = x0 + upper_alpha * d
        upper_x = jnp.where(widening, cand_x, upper_x)
        error, upper_grad = _err_grad_ref(upper_x, quad_a, quad_c)

        inc_cond = error > base_error + c1 * upper_alpha * base_gradient
        if idx > 0:
            inc_cond = jnp.logical_or(inc_cond, error >= prev_error)
        increasing_error = jnp.logical_and(widening, inc_cond)
        zooming = jnp.logical_or(zooming, increasing_error)
        widening = jnp.logical_and(widening, jnp.logical_not(increasing_error))

        g_dot = jnp.sum(upper_grad * d, axis=-1, keepdims=True)
        met = jnp.abs(g_dot) <= (-c2) * base_gradient
        widening = jnp.logical_and(widening, jnp.logical_not(met))

        swapping = jnp.logical_and(widening, g_dot >= 0.0)
        zooming = jnp.logical_or(zooming, swapping)
        upper_alpha, lower_alpha = (jnp.where(swapping, lower_alpha, upper_alpha),
                                    jnp.where(swapping, upper_alpha, lower_alpha))
        lower_x, upper_x = (jnp.where(swapping, upper_x, lower_x),
                            jnp.where(swapping, lower_x, upper_x))
        widening = jnp.logical_and(widening, jnp.logical_not(swapping))

        lower_alpha = jnp.where(widening, upper_alpha, lower_alpha)
        upper_alpha = jnp.where(widening,
                                jnp.minimum(2.0 * upper_alpha, max_step),
                                upper_alpha)
        lower_x = jnp.where(widening, upper_x, lower_x)
        prev_error = error

    lower_error, _ = _err_grad_ref(lower_x, quad_a, quad_c)

    for _ in range(ZOOM_ITERATIONS):
        _, lower_grad = _err_grad_ref(lower_x, quad_a, quad_c)
        _, upper_grad = _err_grad_ref(upper_x, quad_a, quad_c)
        lower_g = jnp.sum(lower_grad * d, axis=-1, keepdims=True)
        upper_g = jnp.sum(upper_grad * d, axis=-1, keepdims=True)
        grad_diff = upper_g - lower_g

        denom = grad_diff + jnp.asarray(1e-8, dtype)
        safe_denom = jnp.where(denom == 0.0, jnp.asarray(1e-12, dtype), denom)
        cand_alpha = lower_alpha - lower_g * (upper_alpha - lower_alpha) / safe_denom
        non_linear = jnp.logical_or(
            grad_diff == 0.0,
            jnp.logical_or(cand_alpha < jnp.minimum(lower_alpha, upper_alpha),
                           cand_alpha > jnp.maximum(lower_alpha, upper_alpha)))
        cand_alpha = jnp.where(non_linear,
                               0.5 * (lower_alpha + upper_alpha), cand_alpha)
        cand_alpha_wide = jnp.where(zooming, cand_alpha, jnp.zeros_like(cand_alpha))

        cand_step = jnp.where(zooming, cand_alpha * d, jnp.zeros_like(d))
        cand_x = jnp.where(zooming, x0 + cand_step, upper_x)
        error, cand_grad = _err_grad_ref(cand_x, quad_a, quad_c)

        inc_cond = error > base_error + c1 * cand_alpha_wide * base_gradient
        increasing_error = jnp.logical_and(
            zooming, jnp.logical_or(error >= lower_error, inc_cond))
        upper_alpha = jnp.where(increasing_error, cand_alpha_wide, upper_alpha)
        upper_x = jnp.where(increasing_error, cand_x, upper_x)

        nie = jnp.logical_and(zooming, jnp.logical_not(increasing_error))
        g_dot = jnp.sum(cand_grad * d, axis=-1, keepdims=True)
        met = jnp.logical_and(nie, jnp.abs(g_dot) <= (-c2) * base_gradient)
        upper_alpha = jnp.where(met, cand_alpha_wide, upper_alpha)
        upper_x = jnp.where(met, cand_x, upper_x)
        zooming = jnp.logical_and(zooming, jnp.logical_not(met))

        reversed_g = (g_dot * (upper_alpha - lower_alpha)) >= 0.0
        swapping = jnp.logical_and(nie, jnp.logical_and(reversed_g, zooming))
        upper_alpha, lower_alpha = (jnp.where(swapping, lower_alpha, upper_alpha),
                                    jnp.where(swapping, upper_alpha, lower_alpha))
        lower_x, upper_x = (jnp.where(swapping, upper_x, lower_x),
                            jnp.where(swapping, lower_x, upper_x))

        nie = jnp.logical_and(nie, zooming)
        lower_alpha = jnp.where(nie, cand_alpha_wide, lower_alpha)
        lower_x = jnp.where(nie, cand_x, lower_x)

    step = upper_alpha * d
    return upper_x, step, upper_alpha


def _check(upper_x, step, alpha, x0, d, quad_a, quad_c):
    B, E, D = x0.shape
    ref_ux, ref_step, ref_alpha = _line_search_math_ref(
        x0.reshape(-1, D), d.reshape(-1, D),
        quad_a.reshape(-1, D), quad_c.reshape(-1, D))
    np.testing.assert_allclose(np.asarray(upper_x).reshape(-1, D),
                               np.asarray(ref_ux), rtol=2e-5, atol=2e-5)
    np.testing.assert_allclose(np.asarray(step).reshape(-1, D),
                               np.asarray(ref_step), rtol=2e-5, atol=2e-5)
    np.testing.assert_allclose(np.asarray(alpha).reshape(-1),
                               np.asarray(ref_alpha).reshape(-1),
                               rtol=2e-5, atol=2e-5)


if __name__ == "__main__":
    D = 32
    # Per-row step-scales chosen so different rows exercise different paths
    # (immediate accept at alpha=1, zoom via secant, multi-step widening,
    # widen-to-max-step) with comfortable margins on every comparison.
    scales = (1.0, 3.0, 0.04, 0.5, 0.01)

    def make_case(key, B, E):
        ka, kc, kx = jax.random.split(key, 3)
        quad_a = 0.5 + jax.random.uniform(ka, (B, E, D), dtype=jnp.float32)
        quad_c = jax.random.normal(kc, (B, E, D), dtype=jnp.float32)
        x0 = jax.random.normal(kx, (B, E, D), dtype=jnp.float32)
        g0 = quad_a * (x0 - quad_c)
        n = B * E
        s = jnp.asarray(scales, jnp.float32)
        reps = (n + len(scales) - 1) // len(scales)
        s_row = jnp.tile(s, reps)[:n].reshape(B, E, 1)
        d = -s_row * g0          # scaled steepest-descent direction
        return x0, d, quad_a, quad_c

    # ---- small case (batch=2, estimates=4, params=32): single tile ----------
    x0, d, qa, qc = make_case(jax.random.PRNGKey(0), 2, 4)
    upper_x, step, alpha = line_search_strong_wolfe(x0, d, qa, qc)
    jax.block_until_ready((upper_x, step, alpha))
    _check(upper_x, step, alpha, x0, d, qa, qc)

    # ---- larger case: exercises the multi-tile grid (>=2 steps) + padding ---
    x02, d2, qa2, qc2 = make_case(jax.random.PRNGKey(1), 2, 600)
    upper_x2, step2, alpha2 = line_search_strong_wolfe(
        x02, d2, qa2, qc2, tile_lanes=128)
    jax.block_until_ready((upper_x2, step2, alpha2))
    _check(upper_x2, step2, alpha2, x02, d2, qa2, qc2)

    print("KERNEL_OK")
</pallas_src>

<mosaic_0001>
module attributes {stable_mosaic.version = 11 : i64} {
  func.func @_line_search_kernel(%arg0: i32, %arg1: memref<24x128xf32, #tpu.memory_space<vmem>>, %arg2: memref<16x128xf32, #tpu.memory_space<vmem>>) attributes {dimension_semantics = [#tpu.dimension_semantics<parallel>], iteration_bounds = array<i64: 1>, scalar_prefetch = 0 : i64, scratch_operands = 0 : i64, tpu.core_type = #tpu.core_type<tc>, window_params = [{transform_indices = @transform_0, window_bounds = array<i64: 24, 128>}, {transform_indices = @transform_1, window_bounds = array<i64: 16, 128>}]} {
    %c0 = arith.constant 0 : index
    %c0_0 = arith.constant 0 : index
    %0 = vector.load %arg1[%c0, %c0_0] : memref<24x128xf32, #tpu.memory_space<vmem>>, vector<24x128xf32>
    %1 = vector.extract_strided_slice %0 {offsets = [0, 0], sizes = [8, 128], strides = [1, 1]} : vector<24x128xf32> to vector<8x128xf32>
    %2 = vector.extract_strided_slice %0 {offsets = [8, 0], sizes = [8, 128], strides = [1, 1]} : vector<24x128xf32> to vector<8x128xf32>
    %3 = vector.extract_strided_slice %0 {offsets = [16, 0], sizes = [8, 128], strides = [1, 1]} : vector<24x128xf32> to vector<8x128xf32>
    %cst = arith.constant 0.000000e+00 : f32
    %4 = vector.broadcast %cst : f32 to vector<8x128xf32>
    %cst_1 = arith.constant 1.000000e+00 : f32
    %5 = vector.broadcast %cst_1 : f32 to vector<8x128xf32>
    %true = arith.constant true
    %6 = vector.broadcast %true : i1 to vector<8x128xi1>
    %false = arith.constant false
    %7 = vector.broadcast %false : i1 to vector<8x128xi1>
    %8 = arith.select %6, %5, %4 : vector<8x128xi1>, vector<8x128xf32>
    %9 = arith.mulf %8, %2 : vector<8x128xf32>
    %10 = arith.addf %1, %9 : vector<8x128xf32>
    %11 = arith.mulf %8, %8 : vector<8x128xf32>
    %cst_2 = arith.constant 5.000000e-01 : f32
    %12 = vector.broadcast %cst_2 : f32 to vector<8x128xf32>
    %13 = arith.mulf %12, %11 : vector<8x128xf32>
    %14 = arith.mulf %13, %3 : vector<8x128xf32>
    %15 = arith.addf %10, %14 : vector<8x128xf32>
    %16 = arith.mulf %8, %3 : vector<8x128xf32>
    %17 = arith.addf %2, %16 : vector<8x128xf32>
    %cst_3 = arith.constant 9.99999974E-5 : f32
    %18 = vector.broadcast %cst_3 : f32 to vector<8x128xf32>
    %19 = arith.mulf %18, %5 : vector<8x128xf32>
    %20 = arith.mulf %19, %2 : vector<8x128xf32>
    %21 = arith.addf %1, %20 : vector<8x128xf32>
    %22 = arith.cmpf ogt, %15, %21 : vector<8x128xf32>
    %23 = arith.andi %6, %22 : vector<8x128xi1>
    %24 = arith.ori %7, %23 : vector<8x128xi1>
    %cst_4 = arith.constant dense<true> : vector<8x128xi1>
    %25 = arith.xori %23, %cst_4 : vector<8x128xi1>
    %26 = arith.andi %6, %25 : vector<8x128xi1>
    %27 = math.absf %17 : vector<8x128xf32>
    %cst_5 = arith.constant 0.000000e+00 : f32
    %cst_6 = arith.constant 0.899999976 : f32
    %28 = arith.subf %cst_5, %cst_6 : f32
    %29 = vector.broadcast %28 : f32 to vector<8x128xf32>
    %30 = arith.mulf %29, %2 : vector<8x128xf32>
    %31 = arith.cmpf ole, %27, %30 : vector<8x128xf32>
    %cst_7 = arith.constant dense<true> : vector<8x128xi1>
    %32 = arith.xori %31, %cst_7 : vector<8x128xi1>
    %33 = arith.andi %26, %32 : vector<8x128xi1>
    %cst_8 = arith.constant 0.000000e+00 : f32
    %34 = vector.broadcast %cst_8 : f32 to vector<8x128xf32>
    %35 = arith.cmpf oge, %17, %34 : vector<8x128xf32>
    %36 = arith.andi %33, %35 : vector<8x128xi1>
    %37 = arith.ori %24, %36 : vector<8x128xi1>
    %38 = arith.select %36, %4, %5 : vector<8x128xi1>, vector<8x128xf32>
    %39 = arith.select %36, %5, %4 : vector<8x128xi1>, vector<8x128xf32>
    %40 = arith.select %36, %4, %8 : vector<8x128xi1>, vector<8x128xf32>
    %41 = arith.select %36, %8, %4 : vector<8x128xi1>, vector<8x128xf32>
    %cst_9 = arith.constant dense<true> : vector<8x128xi1>
    %42 = arith.xori %36, %cst_9 : vector<8x128xi1>
    %43 = arith.andi %33, %42 : vector<8x128xi1>
    %44 = arith.select %43, %38, %39 : vector<8x128xi1>, vector<8x128xf32>
    %cst_10 = arith.constant 2.000000e+00 : f32
    %45 = vector.broadcast %cst_10 : f32 to vector<8x128xf32>
    %46 = arith.mulf %45, %38 : vector<8x128xf32>
    %cst_11 = arith.constant 8.000000e+00 : f32
    %47 = vector.broadcast %cst_11 : f32 to vector<8x128xf32>
    %48 = arith.minimumf %46, %47 : vector<8x128xf32>
    %49 = arith.select %43, %48, %38 : vector<8x128xi1>, vector<8x128xf32>
    %50 = arith.select %43, %40, %41 : vector<8x128xi1>, vector<8x128xf32>
    %51 = arith.select %43, %49, %40 : vector<8x128xi1>, vector<8x128xf32>
    %52 = arith.mulf %51, %2 : vector<8x128xf32>
    %53 = arith.addf %1, %52 : vector<8x128xf32>
    %54 = arith.mulf %51, %51 : vector<8x128xf32>
    %cst_12 = arith.constant 5.000000e-01 : f32
    %55 = vector.broadcast %cst_12 : f32 to vector<8x128xf32>
    %56 = arith.mulf %55, %54 : vector<8x128xf32>
    %57 = arith.mulf %56, %3 : vector<8x128xf32>
    %58 = arith.addf %53, %57 : vector<8x128xf32>
    %59 = arith.mulf %51, %3 : vector<8x128xf32>
    %60 = arith.addf %2, %59 : vector<8x128xf32>
    %cst_13 = arith.constant 9.99999974E-5 : f32
    %61 = vector.broadcast %cst_13 : f32 to vector<8x128xf32>
    %62 = arith.mulf %61, %49 : vector<8x128xf32>
    %63 = arith.mulf %62, %2 : vector<8x128xf32>
    %64 = arith.addf %1, %63 : vector<8x128xf32>
    %65 = arith.cmpf ogt, %58, %64 : vector<8x128xf32>
    %66 = arith.cmpf oge, %58, %15 : vector<8x128xf32>
    %67 = arith.ori %65, %66 : vector<8x128xi1>
    %68 = arith.andi %43, %67 : vector<8x128xi1>
    %69 = arith.ori %37, %68 : vector<8x128xi1>
    %cst_14 = arith.constant dense<true> : vector<8x128xi1>
    %70 = arith.xori %68, %cst_14 : vector<8x128xi1>
    %71 = arith.andi %43, %70 : vector<8x128xi1>
    %72 = math.absf %60 : vector<8x128xf32>
    %cst_15 = arith.constant 0.000000e+00 : f32
    %cst_16 = arith.constant 0.899999976 : f32
    %73 = arith.subf %cst_15, %cst_16 : f32
    %74 = vector.broadcast %73 : f32 to vector<8x128xf32>
    %75 = arith.mulf %74, %2 : vector<8x128xf32>
    %76 = arith.cmpf ole, %72, %75 : vector<8x128xf32>
    %cst_17 = arith.constant dense<true> : vector<8x128xi1>
    %77 = arith.xori %76, %cst_17 : vector<8x128xi1>
    %78 = arith.andi %71, %77 : vector<8x128xi1>
    %cst_18 = arith.constant 0.000000e+00 : f32
    %79 = vector.broadcast %cst_18 : f32 to vector<8x128xf32>
    %80 = arith.cmpf oge, %60, %79 : vector<8x128xf32>
    %81 = arith.andi %78, %80 : vector<8x128xi1>
    %82 = arith.ori %69, %81 : vector<8x128xi1>
    %83 = arith.select %81, %44, %49 : vector<8x128xi1>, vector<8x128xf32>
    %84 = arith.select %81, %49, %44 : vector<8x128xi1>, vector<8x128xf32>
    %85 = arith.select %81, %50, %51 : vector<8x128xi1>, vector<8x128xf32>
    %86 = arith.select %81, %51, %50 : vector<8x128xi1>, vector<8x128xf32>
    %cst_19 = arith.constant dense<true> : vector<8x128xi1>
    %87 = arith.xori %81, %cst_19 : vector<8x128xi1>
    %88 = arith.andi %78, %87 : vector<8x128xi1>
    %89 = arith.select %88, %83, %84 : vector<8x128xi1>, vector<8x128xf32>
    %cst_20 = arith.constant 2.000000e+00 : f32
    %90 = vector.broadcast %cst_20 : f32 to vector<8x128xf32>
    %91 = arith.mulf %90, %83 : vector<8x128xf32>
    %cst_21 = arith.constant 8.000000e+00 : f32
    %92 = vector.broadcast %cst_21 : f32 to vector<8x128xf32>
    %93 = arith.minimumf %91, %92 : vector<8x128xf32>
    %94 = arith.select %88, %93, %83 : vector<8x128xi1>, vector<8x128xf32>
    %95 = arith.select %88, %85, %86 : vector<8x128xi1>, vector<8x128xf32>
    %96 = arith.select %88, %94, %85 : vector<8x128xi1>, vector<8x128xf32>
    %97 = arith.mulf %96, %2 : vector<8x128xf32>
    %98 = arith.addf %1, %97 : vector<8x128xf32>
    %99 = arith.mulf %96, %96 : vector<8x128xf32>
    %cst_22 = arith.constant 5.000000e-01 : f32
    %100 = vector.broadcast %cst_22 : f32 to vector<8x128xf32>
    %101 = arith.mulf %100, %99 : vector<8x128xf32>
    %102 = arith.mulf %101, %3 : vector<8x128xf32>
    %103 = arith.addf %98, %102 : vector<8x128xf32>
    %104 = arith.mulf %96, %3 : vector<8x128xf32>
    %105 = arith.addf %2, %104 : vector<8x128xf32>
    %cst_23 = arith.constant 9.99999974E-5 : f32
    %106 = vector.broadcast %cst_23 : f32 to vector<8x128xf32>
    %107 = arith.mulf %106, %94 : vector<8x128xf32>
    %108 = arith.mulf %107, %2 : vector<8x128xf32>
    %109 = arith.addf %1, %108 : vector<8x128xf32>
    %110 = arith.cmpf ogt, %103, %109 : vector<8x128xf32>
    %111 = arith.cmpf oge, %103, %58 : vector<8x128xf32>
    %112 = arith.ori %110, %111 : vector<8x128xi1>
    %113 = arith.andi %88, %112 : vector<8x128xi1>
    %114 = arith.ori %82, %113 : vector<8x128xi1>
    %cst_24 = arith.constant dense<true> : vector<8x128xi1>
    %115 = arith.xori %113, %cst_24 : vector<8x128xi1>
    %116 = arith.andi %88, %115 : vector<8x128xi1>
    %117 = math.absf %105 : vector<8x128xf32>
    %cst_25 = arith.constant 0.000000e+00 : f32
    %cst_26 = arith.constant 0.899999976 : f32
    %118 = arith.subf %cst_25, %cst_26 : f32
    %119 = vector.broadcast %118 : f32 to vector<8x128xf32>
    %120 = arith.mulf %119, %2 : vector<8x128xf32>
    %121 = arith.cmpf ole, %117, %120 : vector<8x128xf32>
    %cst_27 = arith.constant dense<true> : vector<8x128xi1>
    %122 = arith.xori %121, %cst_27 : vector<8x128xi1>
    %123 = arith.andi %116, %122 : vector<8x128xi1>
    %cst_28 = arith.constant 0.000000e+00 : f32
    %124 = vector.broadcast %cst_28 : f32 to vector<8x128xf32>
    %125 = arith.cmpf oge, %105, %124 : vector<8x128xf32>
    %126 = arith.andi %123, %125 : vector<8x128xi1>
    %127 = arith.ori %114, %126 : vector<8x128xi1>
    %128 = arith.select %126, %89, %94 : vector<8x128xi1>, vector<8x128xf32>
    %129 = arith.select %126, %94, %89 : vector<8x128xi1>, vector<8x128xf32>
    %130 = arith.select %126, %95, %96 : vector<8x128xi1>, vector<8x128xf32>
    %131 = arith.select %126, %96, %95 : vector<8x128xi1>, vector<8x128xf32>
    %cst_29 = arith.constant dense<true> : vector<8x128xi1>
    %132 = arith.xori %126, %cst_29 : vector<8x128xi1>
    %133 = arith.andi %123, %132 : vector<8x128xi1>
    %134 = arith.select %133, %128, %129 : vector<8x128xi1>, vector<8x128xf32>
    %cst_30 = arith.constant 2.000000e+00 : f32
    %135 = vector.broadcast %cst_30 : f32 to vector<8x128xf32>
    %136 = arith.mulf %135, %128 : vector<8x128xf32>
    %cst_31 = arith.constant 8.000000e+00 : f32
    %137 = vector.broadcast %cst_31 : f32 to vector<8x128xf32>
    %138 = arith.minimumf %136, %137 : vector<8x128xf32>
    %139 = arith.select %133, %138, %128 : vector<8x128xi1>, vector<8x128xf32>
    %140 = arith.select %133, %130, %131 : vector<8x128xi1>, vector<8x128xf32>
    %141 = arith.select %133, %139, %130 : vector<8x128xi1>, vector<8x128xf32>
    %142 = arith.mulf %141, %2 : vector<8x128xf32>
    %143 = arith.addf %1, %142 : vector<8x128xf32>
    %144 = arith.mulf %141, %141 : vector<8x128xf32>
    %cst_32 = arith.constant 5.000000e-01 : f32
    %145 = vector.broadcast %cst_32 : f32 to vector<8x128xf32>
    %146 = arith.mulf %145, %144 : vector<8x128xf32>
    %147 = arith.mulf %146, %3 : vector<8x128xf32>
    %148 = arith.addf %143, %147 : vector<8x128xf32>
    %149 = arith.mulf %141, %3 : vector<8x128xf32>
    %150 = arith.addf %2, %149 : vector<8x128xf32>
    %cst_33 = arith.constant 9.99999974E-5 : f32
    %151 = vector.broadcast %cst_33 : f32 to vector<8x128xf32>
    %152 = arith.mulf %151, %139 : vector<8x128xf32>
    %153 = arith.mulf %152, %2 : vector<8x128xf32>
    %154 = arith.addf %1, %153 : vector<8x128xf32>
    %155 = arith.cmpf ogt, %148, %154 : vector<8x128xf32>
    %156 = arith.cmpf oge, %148, %103 : vector<8x128xf32>
    %157 = arith.ori %155, %156 : vector<8x128xi1>
    %158 = arith.andi %133, %157 : vector<8x128xi1>
    %159 = arith.ori %127, %158 : vector<8x128xi1>
    %cst_34 = arith.constant dense<true> : vector<8x128xi1>
    %160 = arith.xori %158, %cst_34 : vector<8x128xi1>
    %161 = arith.andi %133, %160 : vector<8x128xi1>
    %162 = math.absf %150 : vector<8x128xf32>
    %cst_35 = arith.constant 0.000000e+00 : f32
    %cst_36 = arith.constant 0.899999976 : f32
    %163 = arith.subf %cst_35, %cst_36 : f32
    %164 = vector.broadcast %163 : f32 to vector<8x128xf32>
    %165 = arith.mulf %164, %2 : vector<8x128xf32>
    %166 = arith.cmpf ole, %162, %165 : vector<8x128xf32>
    %cst_37 = arith.constant dense<true> : vector<8x128xi1>
    %167 = arith.xori %166, %cst_37 : vector<8x128xi1>
    %168 = arith.andi %161, %167 : vector<8x128xi1>
    %cst_38 = arith.constant 0.000000e+00 : f32
    %169 = vector.broadcast %cst_38 : f32 to vector<8x128xf32>
    %170 = arith.cmpf oge, %150, %169 : vector<8x128xf32>
    %171 = arith.andi %168, %170 : vector<8x128xi1>
    %172 = arith.ori %159, %171 : vector<8x128xi1>
    %173 = arith.select %171, %134, %139 : vector<8x128xi1>, vector<8x128xf32>
    %174 = arith.select %171, %139, %134 : vector<8x128xi1>, vector<8x128xf32>
    %175 = arith.select %171, %140, %141 : vector<8x128xi1>, vector<8x128xf32>
    %176 = arith.select %171, %141, %140 : vector<8x128xi1>, vector<8x128xf32>
    %cst_39 = arith.constant dense<true> : vector<8x128xi1>
    %177 = arith.xori %171, %cst_39 : vector<8x128xi1>
    %178 = arith.andi %168, %177 : vector<8x128xi1>
    %179 = arith.select %178, %173, %174 : vector<8x128xi1>, vector<8x128xf32>
    %cst_40 = arith.constant 2.000000e+00 : f32
    %180 = vector.broadcast %cst_40 : f32 to vector<8x128xf32>
    %181 = arith.mulf %180, %173 : vector<8x128xf32>
    %cst_41 = arith.constant 8.000000e+00 : f32
    %182 = vector.broadcast %cst_41 : f32 to vector<8x128xf32>
    %183 = arith.minimumf %181, %182 : vector<8x128xf32>
    %184 = arith.select %178, %183, %173 : vector<8x128xi1>, vector<8x128xf32>
    %185 = arith.select %178, %175, %176 : vector<8x128xi1>, vector<8x128xf32>
    %186 = arith.mulf %185, %2 : vector<8x128xf32>
    %187 = arith.addf %1, %186 : vector<8x128xf32>
    %188 = arith.mulf %185, %185 : vector<8x128xf32>
    %cst_42 = arith.constant 5.000000e-01 : f32
    %189 = vector.broadcast %cst_42 : f32 to vector<8x128xf32>
    %190 = arith.mulf %189, %188 : vector<8x128xf32>
    %191 = arith.mulf %190, %3 : vector<8x128xf32>
    %192 = arith.addf %187, %191 : vector<8x128xf32>
    %193 = arith.mulf %185, %3 : vector<8x128xf32>
    %194 = arith.addf %2, %193 : vector<8x128xf32>
    %195 = arith.mulf %175, %3 : vector<8x128xf32>
    %196 = arith.addf %2, %195 : vector<8x128xf32>
    %197 = arith.subf %196, %194 : vector<8x128xf32>
    %cst_43 = arith.constant 9.99999993E-9 : f32
    %198 = vector.broadcast %cst_43 : f32 to vector<8x128xf32>
    %199 = arith.addf %197, %198 : vector<8x128xf32>
    %cst_44 = arith.constant 0.000000e+00 : f32
    %200 = vector.broadcast %cst_44 : f32 to vector<8x128xf32>
    %201 = arith.cmpf oeq, %199, %200 : vector<8x128xf32>
    %cst_45 = arith.constant 9.99999996E-13 : f32
    %202 = vector.broadcast %cst_45 : f32 to vector<8x128xf32>
    %203 = arith.select %201, %202, %199 : vector<8x128xi1>, vector<8x128xf32>
    %204 = arith.subf %184, %179 : vector<8x128xf32>
    %205 = arith.mulf %194, %204 : vector<8x128xf32>
    %206 = arith.divf %205, %203 : vector<8x128xf32>
    %207 = arith.subf %179, %206 : vector<8x128xf32>
    %cst_46 = arith.constant 0.000000e+00 : f32
    %208 = vector.broadcast %cst_46 : f32 to vector<8x128xf32>
    %209 = arith.cmpf oeq, %197, %208 : vector<8x128xf32>
    %210 = arith.minimumf %179, %184 : vector<8x128xf32>
    %211 = arith.cmpf olt, %207, %210 : vector<8x128xf32>
    %212 = arith.maximumf %179, %184 : vector<8x128xf32>
    %213 = arith.cmpf ogt, %207, %212 : vector<8x128xf32>
    %214 = arith.ori %211, %213 : vector<8x128xi1>
    %215 = arith.ori %209, %214 : vector<8x128xi1>
    %216 = arith.addf %179, %184 : vector<8x128xf32>
    %cst_47 = arith.constant 5.000000e-01 : f32
    %217 = vector.broadcast %cst_47 : f32 to vector<8x128xf32>
    %218 = arith.mulf %217, %216 : vector<8x128xf32>
    %219 = arith.select %215, %218, %207 : vector<8x128xi1>, vector<8x128xf32>
    %220 = arith.select %172, %219, %4 : vector<8x128xi1>, vector<8x128xf32>
    %221 = arith.mulf %220, %2 : vector<8x128xf32>
    %222 = arith.addf %1, %221 : vector<8x128xf32>
    %223 = arith.mulf %220, %220 : vector<8x128xf32>
    %cst_48 = arith.constant 5.000000e-01 : f32
    %224 = vector.broadcast %cst_48 : f32 to vector<8x128xf32>
    %225 = arith.mulf %224, %223 : vector<8x128xf32>
    %226 = arith.mulf %225, %3 : vector<8x128xf32>
    %227 = arith.addf %222, %226 : vector<8x128xf32>
    %228 = arith.mulf %220, %3 : vector<8x128xf32>
    %229 = arith.addf %2, %228 : vector<8x128xf32>
    %cst_49 = arith.constant 9.99999974E-5 : f32
    %230 = vector.broadcast %cst_49 : f32 to vector<8x128xf32>
    %231 = arith.mulf %230, %220 : vector<8x128xf32>
    %232 = arith.mulf %231, %2 : vector<8x128xf32>
    %233 = arith.addf %1, %232 : vector<8x128xf32>
    %234 = arith.cmpf ogt, %227, %233 : vector<8x128xf32>
    %235 = arith.cmpf oge, %227, %192 : vector<8x128xf32>
    %236 = arith.ori %235, %234 : vector<8x128xi1>
    %237 = arith.andi %172, %236 : vector<8x128xi1>
    %238 = arith.select %237, %220, %184 : vector<8x128xi1>, vector<8x128xf32>
    %239 = arith.select %237, %220, %175 : vector<8x128xi1>, vector<8x128xf32>
    %cst_50 = arith.constant dense<true> : vector<8x128xi1>
    %240 = arith.xori %237, %cst_50 : vector<8x128xi1>
    %241 = arith.andi %172, %240 : vector<8x128xi1>
    %242 = math.absf %229 : vector<8x128xf32>
    %cst_51 = arith.constant 0.000000e+00 : f32
    %cst_52 = arith.constant 0.899999976 : f32
    %243 = arith.subf %cst_51, %cst_52 : f32
    %244 = vector.broadcast %243 : f32 to vector<8x128xf32>
    %245 = arith.mulf %244, %2 : vector<8x128xf32>
    %246 = arith.cmpf ole, %242, %245 : vector<8x128xf32>
    %247 = arith.andi %241, %246 : vector<8x128xi1>
    %248 = arith.select %247, %220, %238 : vector<8x128xi1>, vector<8x128xf32>
    %249 = arith.select %247, %220, %239 : vector<8x128xi1>, vector<8x128xf32>
    %cst_53 = arith.constant dense<true> : vector<8x128xi1>
    %250 = arith.xori %247, %cst_53 : vector<8x128xi1>
    %251 = arith.andi %172, %250 : vector<8x128xi1>
    %252 = arith.subf %248, %179 : vector<8x128xf32>
    %253 = arith.mulf %229, %252 : vector<8x128xf32>
    %cst_54 = arith.constant 0.000000e+00 : f32
    %254 = vector.broadcast %cst_54 : f32 to vector<8x128xf32>
    %255 = arith.cmpf oge, %253, %254 : vector<8x128xf32>
    %256 = arith.andi %255, %251 : vector<8x128xi1>
    %257 = arith.andi %241, %256 : vector<8x128xi1>
    %258 = arith.select %257, %179, %248 : vector<8x128xi1>, vector<8x128xf32>
    %259 = arith.select %257, %248, %179 : vector<8x128xi1>, vector<8x128xf32>
    %260 = arith.select %257, %185, %249 : vector<8x128xi1>, vector<8x128xf32>
    %261 = arith.select %257, %249, %185 : vector<8x128xi1>, vector<8x128xf32>
    %262 = arith.andi %241, %251 : vector<8x128xi1>
    %263 = arith.select %262, %220, %259 : vector<8x128xi1>, vector<8x128xf32>
    %264 = arith.select %262, %220, %261 : vector<8x128xi1>, vector<8x128xf32>
    %265 = arith.mulf %264, %3 : vector<8x128xf32>
    %266 = arith.addf %2, %265 : vector<8x128xf32>
    %267 = arith.mulf %260, %3 : vector<8x128xf32>
    %268 = arith.addf %2, %267 : vector<8x128xf32>
    %269 = arith.subf %268, %266 : vector<8x128xf32>
    %cst_55 = arith.constant 9.99999993E-9 : f32
    %270 = vector.broadcast %cst_55 : f32 to vector<8x128xf32>
    %271 = arith.addf %269, %270 : vector<8x128xf32>
    %cst_56 = arith.constant 0.000000e+00 : f32
    %272 = vector.broadcast %cst_56 : f32 to vector<8x128xf32>
    %273 = arith.cmpf oeq, %271, %272 : vector<8x128xf32>
    %cst_57 = arith.constant 9.99999996E-13 : f32
    %274 = vector.broadcast %cst_57 : f32 to vector<8x128xf32>
    %275 = arith.select %273, %274, %271 : vector<8x128xi1>, vector<8x128xf32>
    %276 = arith.subf %258, %263 : vector<8x128xf32>
    %277 = arith.mulf %266, %276 : vector<8x128xf32>
    %278 = arith.divf %277, %275 : vector<8x128xf32>
    %279 = arith.subf %263, %278 : vector<8x128xf32>
    %cst_58 = arith.constant 0.000000e+00 : f32
    %280 = vector.broadcast %cst_58 : f32 to vector<8x128xf32>
    %281 = arith.cmpf oeq, %269, %280 : vector<8x128xf32>
    %282 = arith.minimumf %263, %258 : vector<8x128xf32>
    %283 = arith.cmpf olt, %279, %282 : vector<8x128xf32>
    %284 = arith.maximumf %263, %258 : vector<8x128xf32>
    %285 = arith.cmpf ogt, %279, %284 : vector<8x128xf32>
    %286 = arith.ori %283, %285 : vector<8x128xi1>
    %287 = arith.ori %281, %286 : vector<8x128xi1>
    %288 = arith.addf %263, %258 : vector<8x128xf32>
    %cst_59 = arith.constant 5.000000e-01 : f32
    %289 = vector.broadcast %cst_59 : f32 to vector<8x128xf32>
    %290 = arith.mulf %289, %288 : vector<8x128xf32>
    %291 = arith.select %287, %290, %279 : vector<8x128xi1>, vector<8x128xf32>
    %292 = arith.select %251, %291, %4 : vector<8x128xi1>, vector<8x128xf32>
    %293 = arith.mulf %292, %2 : vector<8x128xf32>
    %294 = arith.addf %1, %293 : vector<8x128xf32>
    %295 = arith.mulf %292, %292 : vector<8x128xf32>
    %cst_60 = arith.constant 5.000000e-01 : f32
    %296 = vector.broadcast %cst_60 : f32 to vector<8x128xf32>
    %297 = arith.mulf %296, %295 : vector<8x128xf32>
    %298 = arith.mulf %297, %3 : vector<8x128xf32>
    %299 = arith.addf %294, %298 : vector<8x128xf32>
    %300 = arith.mulf %292, %3 : vector<8x128xf32>
    %301 = arith.addf %2, %300 : vector<8x128xf32>
    %cst_61 = arith.constant 9.99999974E-5 : f32
    %302 = vector.broadcast %cst_61 : f32 to vector<8x128xf32>
    %303 = arith.mulf %302, %292 : vector<8x128xf32>
    %304 = arith.mulf %303, %2 : vector<8x128xf32>
    %305 = arith.addf %1, %304 : vector<8x128xf32>
    %306 = arith.cmpf ogt, %299, %305 : vector<8x128xf32>
    %307 = arith.cmpf oge, %299, %192 : vector<8x128xf32>
    %308 = arith.ori %307, %306 : vector<8x128xi1>
    %309 = arith.andi %251, %308 : vector<8x128xi1>
    %310 = arith.select %309, %292, %258 : vector<8x128xi1>, vector<8x128xf32>
    %311 = arith.select %309, %292, %260 : vector<8x128xi1>, vector<8x128xf32>
    %cst_62 = arith.constant dense<true> : vector<8x128xi1>
    %312 = arith.xori %309, %cst_62 : vector<8x128xi1>
    %313 = arith.andi %251, %312 : vector<8x128xi1>
    %314 = math.absf %301 : vector<8x128xf32>
    %cst_63 = arith.constant 0.000000e+00 : f32
    %cst_64 = arith.constant 0.899999976 : f32
    %315 = arith.subf %cst_63, %cst_64 : f32
    %316 = vector.broadcast %315 : f32 to vector<8x128xf32>
    %317 = arith.mulf %316, %2 : vector<8x128xf32>
    %318 = arith.cmpf ole, %314, %317 : vector<8x128xf32>
    %319 = arith.andi %313, %318 : vector<8x128xi1>
    %320 = arith.select %319, %292, %310 : vector<8x128xi1>, vector<8x128xf32>
    %321 = arith.select %319, %292, %311 : vector<8x128xi1>, vector<8x128xf32>
    %cst_65 = arith.constant dense<true> : vector<8x128xi1>
    %322 = arith.xori %319, %cst_65 : vector<8x128xi1>
    %323 = arith.andi %251, %322 : vector<8x128xi1>
    %324 = arith.subf %320, %263 : vector<8x128xf32>
    %325 = arith.mulf %301, %324 : vector<8x128xf32>
    %cst_66 = arith.constant 0.000000e+00 : f32
    %326 = vector.broadcast %cst_66 : f32 to vector<8x128xf32>
    %327 = arith.cmpf oge, %325, %326 : vector<8x128xf32>
    %328 = arith.andi %327, %323 : vector<8x128xi1>
    %329 = arith.andi %313, %328 : vector<8x128xi1>
    %330 = arith.select %329, %263, %320 : vector<8x128xi1>, vector<8x128xf32>
    %331 = arith.select %329, %320, %263 : vector<8x128xi1>, vector<8x128xf32>
    %332 = arith.select %329, %264, %321 : vector<8x128xi1>, vector<8x128xf32>
    %333 = arith.select %329, %321, %264 : vector<8x128xi1>, vector<8x128xf32>
    %334 = arith.andi %313, %323 : vector<8x128xi1>
    %335 = arith.select %334, %292, %331 : vector<8x128xi1>, vector<8x128xf32>
    %336 = arith.select %334, %292, %333 : vector<8x128xi1>, vector<8x128xf32>
    %337 = arith.mulf %336, %3 : vector<8x128xf32>
    %338 = arith.addf %2, %337 : vector<8x128xf32>
    %339 = arith.mulf %332, %3 : vector<8x128xf32>
    %340 = arith.addf %2, %339 : vector<8x128xf32>
    %341 = arith.subf %340, %338 : vector<8x128xf32>
    %cst_67 = arith.constant 9.99999993E-9 : f32
    %342 = vector.broadcast %cst_67 : f32 to vector<8x128xf32>
    %343 = arith.addf %341, %342 : vector<8x128xf32>
    %cst_68 = arith.constant 0.000000e+00 : f32
    %344 = vector.broadcast %cst_68 : f32 to vector<8x128xf32>
    %345 = arith.cmpf oeq, %343, %344 : vector<8x128xf32>
    %cst_69 = arith.constant 9.99999996E-13 : f32
    %346 = vector.broadcast %cst_69 : f32 to vector<8x128xf32>
    %347 = arith.select %345, %346, %343 : vector<8x128xi1>, vector<8x128xf32>
    %348 = arith.subf %330, %335 : vector<8x128xf32>
    %349 = arith.mulf %338, %348 : vector<8x128xf32>
    %350 = arith.divf %349, %347 : vector<8x128xf32>
    %351 = arith.subf %335, %350 : vector<8x128xf32>
    %cst_70 = arith.constant 0.000000e+00 : f32
    %352 = vector.broadcast %cst_70 : f32 to vector<8x128xf32>
    %353 = arith.cmpf oeq, %341, %352 : vector<8x128xf32>
    %354 = arith.minimumf %335, %330 : vector<8x128xf32>
    %355 = arith.cmpf olt, %351, %354 : vector<8x128xf32>
    %356 = arith.maximumf %335, %330 : vector<8x128xf32>
    %357 = arith.cmpf ogt, %351, %356 : vector<8x128xf32>
    %358 = arith.ori %355, %357 : vector<8x128xi1>
    %359 = arith.ori %353, %358 : vector<8x128xi1>
    %360 = arith.addf %335, %330 : vector<8x128xf32>
    %cst_71 = arith.constant 5.000000e-01 : f32
    %361 = vector.broadcast %cst_71 : f32 to vector<8x128xf32>
    %362 = arith.mulf %361, %360 : vector<8x128xf32>
    %363 = arith.select %359, %362, %351 : vector<8x128xi1>, vector<8x128xf32>
    %364 = arith.select %323, %363, %4 : vector<8x128xi1>, vector<8x128xf32>
    %365 = arith.mulf %364, %2 : vector<8x128xf32>
    %366 = arith.addf %1, %365 : vector<8x128xf32>
    %367 = arith.mulf %364, %364 : vector<8x128xf32>
    %cst_72 = arith.constant 5.000000e-01 : f32
    %368 = vector.broadcast %cst_72 : f32 to vector<8x128xf32>
    %369 = arith.mulf %368, %367 : vector<8x128xf32>
    %370 = arith.mulf %369, %3 : vector<8x128xf32>
    %371 = arith.addf %366, %370 : vector<8x128xf32>
    %372 = arith.mulf %364, %3 : vector<8x128xf32>
    %373 = arith.addf %2, %372 : vector<8x128xf32>
    %cst_73 = arith.constant 9.99999974E-5 : f32
    %374 = vector.broadcast %cst_73 : f32 to vector<8x128xf32>
    %375 = arith.mulf %374, %364 : vector<8x128xf32>
    %376 = arith.mulf %375, %2 : vector<8x128xf32>
    %377 = arith.addf %1, %376 : vector<8x128xf32>
    %378 = arith.cmpf ogt, %371, %377 : vector<8x128xf32>
    %379 = arith.cmpf oge, %371, %192 : vector<8x128xf32>
    %380 = arith.ori %379, %378 : vector<8x128xi1>
    %381 = arith.andi %323, %380 : vector<8x128xi1>
    %382 = arith.select %381, %364, %330 : vector<8x128xi1>, vector<8x128xf32>
    %383 = arith.select %381, %364, %332 : vector<8x128xi1>, vector<8x128xf32>
    %cst_74 = arith.constant dense<true> : vector<8x128xi1>
    %384 = arith.xori %381, %cst_74 : vector<8x128xi1>
    %385 = arith.andi %323, %384 : vector<8x128xi1>
    %386 = math.absf %373 : vector<8x128xf32>
    %cst_75 = arith.constant 0.000000e+00 : f32
    %cst_76 = arith.constant 0.899999976 : f32
    %387 = arith.subf %cst_75, %cst_76 : f32
    %388 = vector.broadcast %387 : f32 to vector<8x128xf32>
    %389 = arith.mulf %388, %2 : vector<8x128xf32>
    %390 = arith.cmpf ole, %386, %389 : vector<8x128xf32>
    %391 = arith.andi %385, %390 : vector<8x128xi1>
    %392 = arith.select %391, %364, %382 : vector<8x128xi1>, vector<8x128xf32>
    %393 = arith.select %391, %364, %383 : vector<8x128xi1>, vector<8x128xf32>
    %cst_77 = arith.constant dense<true> : vector<8x128xi1>
    %394 = arith.xori %391, %cst_77 : vector<8x128xi1>
    %395 = arith.andi %323, %394 : vector<8x128xi1>
    %396 = arith.subf %392, %335 : vector<8x128xf32>
    %397 = arith.mulf %373, %396 : vector<8x128xf32>
    %cst_78 = arith.constant 0.000000e+00 : f32
    %398 = vector.broadcast %cst_78 : f32 to vector<8x128xf32>
    %399 = arith.cmpf oge, %397, %398 : vector<8x128xf32>
    %400 = arith.andi %399, %395 : vector<8x128xi1>
    %401 = arith.andi %385, %400 : vector<8x128xi1>
    %402 = arith.select %401, %335, %392 : vector<8x128xi1>, vector<8x128xf32>
    %403 = arith.select %401, %392, %335 : vector<8x128xi1>, vector<8x128xf32>
    %404 = arith.select %401, %336, %393 : vector<8x128xi1>, vector<8x128xf32>
    %405 = arith.select %401, %393, %336 : vector<8x128xi1>, vector<8x128xf32>
    %406 = arith.andi %385, %395 : vector<8x128xi1>
    %407 = arith.select %406, %364, %403 : vector<8x128xi1>, vector<8x128xf32>
    %408 = arith.select %406, %364, %405 : vector<8x128xi1>, vector<8x128xf32>
    %409 = arith.mulf %408, %3 : vector<8x128xf32>
    %410 = arith.addf %2, %409 : vector<8x128xf32>
    %411 = arith.mulf %404, %3 : vector<8x128xf32>
    %412 = arith.addf %2, %411 : vector<8x128xf32>
    %413 = arith.subf %412, %410 : vector<8x128xf32>
    %cst_79 = arith.constant 9.99999993E-9 : f32
    %414 = vector.broadcast %cst_79 : f32 to vector<8x128xf32>
    %415 = arith.addf %413, %414 : vector<8x128xf32>
    %cst_80 = arith.constant 0.000000e+00 : f32
    %416 = vector.broadcast %cst_80 : f32 to vector<8x128xf32>
    %417 = arith.cmpf oeq, %415, %416 : vector<8x128xf32>
    %cst_81 = arith.constant 9.99999996E-13 : f32
    %418 = vector.broadcast %cst_81 : f32 to vector<8x128xf32>
    %419 = arith.select %417, %418, %415 : vector<8x128xi1>, vector<8x128xf32>
    %420 = arith.subf %402, %407 : vector<8x128xf32>
    %421 = arith.mulf %410, %420 : vector<8x128xf32>
    %422 = arith.divf %421, %419 : vector<8x128xf32>
    %423 = arith.subf %407, %422 : vector<8x128xf32>
    %cst_82 = arith.constant 0.000000e+00 : f32
    %424 = vector.broadcast %cst_82 : f32 to vector<8x128xf32>
    %425 = arith.cmpf oeq, %413, %424 : vector<8x128xf32>
    %426 = arith.minimumf %407, %402 : vector<8x128xf32>
    %427 = arith.cmpf olt, %423, %426 : vector<8x128xf32>
    %428 = arith.maximumf %407, %402 : vector<8x128xf32>
    %429 = arith.cmpf ogt, %423, %428 : vector<8x128xf32>
    %430 = arith.ori %427, %429 : vector<8x128xi1>
    %431 = arith.ori %425, %430 : vector<8x128xi1>
    %432 = arith.addf %407, %402 : vector<8x128xf32>
    %cst_83 = arith.constant 5.000000e-01 : f32
    %433 = vector.broadcast %cst_83 : f32 to vector<8x128xf32>
    %434 = arith.mulf %433, %432 : vector<8x128xf32>
    %435 = arith.select %431, %434, %423 : vector<8x128xi1>, vector<8x128xf32>
    %436 = arith.select %395, %435, %4 : vector<8x128xi1>, vector<8x128xf32>
    %437 = arith.mulf %436, %2 : vector<8x128xf32>
    %438 = arith.addf %1, %437 : vector<8x128xf32>
    %439 = arith.mulf %436, %436 : vector<8x128xf32>
    %cst_84 = arith.constant 5.000000e-01 : f32
    %440 = vector.broadcast %cst_84 : f32 to vector<8x128xf32>
    %441 = arith.mulf %440, %439 : vector<8x128xf32>
    %442 = arith.mulf %441, %3 : vector<8x128xf32>
    %443 = arith.addf %438, %442 : vector<8x128xf32>
    %444 = arith.mulf %436, %3 : vector<8x128xf32>
    %445 = arith.addf %2, %444 : vector<8x128xf32>
    %cst_85 = arith.constant 9.99999974E-5 : f32
    %446 = vector.broadcast %cst_85 : f32 to vector<8x128xf32>
    %447 = arith.mulf %446, %436 : vector<8x128xf32>
    %448 = arith.mulf %447, %2 : vector<8x128xf32>
    %449 = arith.addf %1, %448 : vector<8x128xf32>
    %450 = arith.cmpf ogt, %443, %449 : vector<8x128xf32>
    %451 = arith.cmpf oge, %443, %192 : vector<8x128xf32>
    %452 = arith.ori %451, %450 : vector<8x128xi1>
    %453 = arith.andi %395, %452 : vector<8x128xi1>
    %454 = arith.select %453, %436, %402 : vector<8x128xi1>, vector<8x128xf32>
    %455 = arith.select %453, %436, %404 : vector<8x128xi1>, vector<8x128xf32>
    %cst_86 = arith.constant dense<true> : vector<8x128xi1>
    %456 = arith.xori %453, %cst_86 : vector<8x128xi1>
    %457 = arith.andi %395, %456 : vector<8x128xi1>
    %458 = math.absf %445 : vector<8x128xf32>
    %cst_87 = arith.constant 0.000000e+00 : f32
    %cst_88 = arith.constant 0.899999976 : f32
    %459 = arith.subf %cst_87, %cst_88 : f32
    %460 = vector.broadcast %459 : f32 to vector<8x128xf32>
    %461 = arith.mulf %460, %2 : vector<8x128xf32>
    %462 = arith.cmpf ole, %458, %461 : vector<8x128xf32>
    %463 = arith.andi %457, %462 : vector<8x128xi1>
    %464 = arith.select %463, %436, %454 : vector<8x128xi1>, vector<8x128xf32>
    %465 = arith.select %463, %436, %455 : vector<8x128xi1>, vector<8x128xf32>
    %cst_89 = arith.constant dense<true> : vector<8x128xi1>
    %466 = arith.xori %463, %cst_89 : vector<8x128xi1>
    %467 = arith.andi %395, %466 : vector<8x128xi1>
    %468 = arith.subf %464, %407 : vector<8x128xf32>
    %469 = arith.mulf %445, %468 : vector<8x128xf32>
    %cst_90 = arith.constant 0.000000e+00 : f32
    %470 = vector.broadcast %cst_90 : f32 to vector<8x128xf32>
    %471 = arith.cmpf oge, %469, %470 : vector<8x128xf32>
    %472 = arith.andi %471, %467 : vector<8x128xi1>
    %473 = arith.andi %457, %472 : vector<8x128xi1>
    %474 = arith.select %473, %407, %464 : vector<8x128xi1>, vector<8x128xf32>
    %475 = arith.select %473, %464, %407 : vector<8x128xi1>, vector<8x128xf32>
    %476 = arith.select %473, %408, %465 : vector<8x128xi1>, vector<8x128xf32>
    %477 = arith.select %473, %465, %408 : vector<8x128xi1>, vector<8x128xf32>
    %478 = arith.andi %457, %467 : vector<8x128xi1>
    %479 = arith.select %478, %436, %475 : vector<8x128xi1>, vector<8x128xf32>
    %480 = arith.select %478, %436, %477 : vector<8x128xi1>, vector<8x128xf32>
    %481 = arith.mulf %480, %3 : vector<8x128xf32>
    %482 = arith.addf %2, %481 : vector<8x128xf32>
    %483 = arith.mulf %476, %3 : vector<8x128xf32>
    %484 = arith.addf %2, %483 : vector<8x128xf32>
    %485 = arith.subf %484, %482 : vector<8x128xf32>
    %cst_91 = arith.constant 9.99999993E-9 : f32
    %486 = vector.broadcast %cst_91 : f32 to vector<8x128xf32>
    %487 = arith.addf %485, %486 : vector<8x128xf32>
    %cst_92 = arith.constant 0.000000e+00 : f32
    %488 = vector.broadcast %cst_92 : f32 to vector<8x128xf32>
    %489 = arith.cmpf oeq, %487, %488 : vector<8x128xf32>
    %cst_93 = arith.constant 9.99999996E-13 : f32
    %490 = vector.broadcast %cst_93 : f32 to vector<8x128xf32>
    %491 = arith.select %489, %490, %487 : vector<8x128xi1>, vector<8x128xf32>
    %492 = arith.subf %474, %479 : vector<8x128xf32>
    %493 = arith.mulf %482, %492 : vector<8x128xf32>
    %494 = arith.divf %493, %491 : vector<8x128xf32>
    %495 = arith.subf %479, %494 : vector<8x128xf32>
    %cst_94 = arith.constant 0.000000e+00 : f32
    %496 = vector.broadcast %cst_94 : f32 to vector<8x128xf32>
    %497 = arith.cmpf oeq, %485, %496 : vector<8x128xf32>
    %498 = arith.minimumf %479, %474 : vector<8x128xf32>
    %499 = arith.cmpf olt, %495, %498 : vector<8x128xf32>
    %500 = arith.maximumf %479, %474 : vector<8x128xf32>
    %501 = arith.cmpf ogt, %495, %500 : vector<8x128xf32>
    %502 = arith.ori %499, %501 : vector<8x128xi1>
    %503 = arith.ori %497, %502 : vector<8x128xi1>
    %504 = arith.addf %479, %474 : vector<8x128xf32>
    %cst_95 = arith.constant 5.000000e-01 : f32
    %505 = vector.broadcast %cst_95 : f32 to vector<8x128xf32>
    %506 = arith.mulf %505, %504 : vector<8x128xf32>
    %507 = arith.select %503, %506, %495 : vector<8x128xi1>, vector<8x128xf32>
    %508 = arith.select %467, %507, %4 : vector<8x128xi1>, vector<8x128xf32>
    %509 = arith.mulf %508, %2 : vector<8x128xf32>
    %510 = arith.addf %1, %509 : vector<8x128xf32>
    %511 = arith.mulf %508, %508 : vector<8x128xf32>
    %cst_96 = arith.constant 5.000000e-01 : f32
    %512 = vector.broadcast %cst_96 : f32 to vector<8x128xf32>
    %513 = arith.mulf %512, %511 : vector<8x128xf32>
    %514 = arith.mulf %513, %3 : vector<8x128xf32>
    %515 = arith.addf %510, %514 : vector<8x128xf32>
    %516 = arith.mulf %508, %3 : vector<8x128xf32>
    %517 = arith.addf %2, %516 : vector<8x128xf32>
    %cst_97 = arith.constant 9.99999974E-5 : f32
    %518 = vector.broadcast %cst_97 : f32 to vector<8x128xf32>
    %519 = arith.mulf %518, %508 : vector<8x128xf32>
    %520 = arith.mulf %519, %2 : vector<8x128xf32>
    %521 = arith.addf %1, %520 : vector<8x128xf32>
    %522 = arith.cmpf ogt, %515, %521 : vector<8x128xf32>
    %523 = arith.cmpf oge, %515, %192 : vector<8x128xf32>
    %524 = arith.ori %523, %522 : vector<8x128xi1>
    %525 = arith.andi %467, %524 : vector<8x128xi1>
    %526 = arith.select %525, %508, %474 : vector<8x128xi1>, vector<8x128xf32>
    %527 = arith.select %525, %508, %476 : vector<8x128xi1>, vector<8x128xf32>
    %cst_98 = arith.constant dense<true> : vector<8x128xi1>
    %528 = arith.xori %525, %cst_98 : vector<8x128xi1>
    %529 = arith.andi %467, %528 : vector<8x128xi1>
    %530 = math.absf %517 : vector<8x128xf32>
    %cst_99 = arith.constant 0.000000e+00 : f32
    %cst_100 = arith.constant 0.899999976 : f32
    %531 = arith.subf %cst_99, %cst_100 : f32
    %532 = vector.broadcast %531 : f32 to vector<8x128xf32>
    %533 = arith.mulf %532, %2 : vector<8x128xf32>
    %534 = arith.cmpf ole, %530, %533 : vector<8x128xf32>
    %535 = arith.andi %529, %534 : vector<8x128xi1>
    %536 = arith.select %535, %508, %526 : vector<8x128xi1>, vector<8x128xf32>
    %537 = arith.select %535, %508, %527 : vector<8x128xi1>, vector<8x128xf32>
    %cst_101 = arith.constant dense<true> : vector<8x128xi1>
    %538 = arith.xori %535, %cst_101 : vector<8x128xi1>
    %539 = arith.andi %467, %538 : vector<8x128xi1>
    %540 = arith.subf %536, %479 : vector<8x128xf32>
    %541 = arith.mulf %517, %540 : vector<8x128xf32>
    %cst_102 = arith.constant 0.000000e+00 : f32
    %542 = vector.broadcast %cst_102 : f32 to vector<8x128xf32>
    %543 = arith.cmpf oge, %541, %542 : vector<8x128xf32>
    %544 = arith.andi %543, %539 : vector<8x128xi1>
    %545 = arith.andi %529, %544 : vector<8x128xi1>
    %546 = arith.select %545, %479, %536 : vector<8x128xi1>, vector<8x128xf32>
    %547 = arith.select %545, %536, %479 : vector<8x128xi1>, vector<8x128xf32>
    %548 = arith.select %545, %480, %537 : vector<8x128xi1>, vector<8x128xf32>
    %549 = arith.select %545, %537, %480 : vector<8x128xi1>, vector<8x128xf32>
    %550 = arith.andi %529, %539 : vector<8x128xi1>
    %551 = arith.select %550, %508, %547 : vector<8x128xi1>, vector<8x128xf32>
    %552 = arith.select %550, %508, %549 : vector<8x128xi1>, vector<8x128xf32>
    %553 = arith.mulf %552, %3 : vector<8x128xf32>
    %554 = arith.addf %2, %553 : vector<8x128xf32>
    %555 = arith.mulf %548, %3 : vector<8x128xf32>
    %556 = arith.addf %2, %555 : vector<8x128xf32>
    %557 = arith.subf %556, %554 : vector<8x128xf32>
    %cst_103 = arith.constant 9.99999993E-9 : f32
    %558 = vector.broadcast %cst_103 : f32 to vector<8x128xf32>
    %559 = arith.addf %557, %558 : vector<8x128xf32>
    %cst_104 = arith.constant 0.000000e+00 : f32
    %560 = vector.broadcast %cst_104 : f32 to vector<8x128xf32>
    %561 = arith.cmpf oeq, %559, %560 : vector<8x128xf32>
    %cst_105 = arith.constant 9.99999996E-13 : f32
    %562 = vector.broadcast %cst_105 : f32 to vector<8x128xf32>
    %563 = arith.select %561, %562, %559 : vector<8x128xi1>, vector<8x128xf32>
    %564 = arith.subf %546, %551 : vector<8x128xf32>
    %565 = arith.mulf %554, %564 : vector<8x128xf32>
    %566 = arith.divf %565, %563 : vector<8x128xf32>
    %567 = arith.subf %551, %566 : vector<8x128xf32>
    %cst_106 = arith.constant 0.000000e+00 : f32
    %568 = vector.broadcast %cst_106 : f32 to vector<8x128xf32>
    %569 = arith.cmpf oeq, %557, %568 : vector<8x128xf32>
    %570 = arith.minimumf %551, %546 : vector<8x128xf32>
    %571 = arith.cmpf olt, %567, %570 : vector<8x128xf32>
    %572 = arith.maximumf %551, %546 : vector<8x128xf32>
    %573 = arith.cmpf ogt, %567, %572 : vector<8x128xf32>
    %574 = arith.ori %571, %573 : vector<8x128xi1>
    %575 = arith.ori %569, %574 : vector<8x128xi1>
    %576 = arith.addf %551, %546 : vector<8x128xf32>
    %cst_107 = arith.constant 5.000000e-01 : f32
    %577 = vector.broadcast %cst_107 : f32 to vector<8x128xf32>
    %578 = arith.mulf %577, %576 : vector<8x128xf32>
    %579 = arith.select %575, %578, %567 : vector<8x128xi1>, vector<8x128xf32>
    %580 = arith.select %539, %579, %4 : vector<8x128xi1>, vector<8x128xf32>
    %581 = arith.mulf %580, %2 : vector<8x128xf32>
    %582 = arith.addf %1, %581 : vector<8x128xf32>
    %583 = arith.mulf %580, %580 : vector<8x128xf32>
    %cst_108 = arith.constant 5.000000e-01 : f32
    %584 = vector.broadcast %cst_108 : f32 to vector<8x128xf32>
    %585 = arith.mulf %584, %583 : vector<8x128xf32>
    %586 = arith.mulf %585, %3 : vector<8x128xf32>
    %587 = arith.addf %582, %586 : vector<8x128xf32>
    %588 = arith.mulf %580, %3 : vector<8x128xf32>
    %589 = arith.addf %2, %588 : vector<8x128xf32>
    %cst_109 = arith.constant 9.99999974E-5 : f32
    %590 = vector.broadcast %cst_109 : f32 to vector<8x128xf32>
    %591 = arith.mulf %590, %580 : vector<8x128xf32>
    %592 = arith.mulf %591, %2 : vector<8x128xf32>
    %593 = arith.addf %1, %592 : vector<8x128xf32>
    %594 = arith.cmpf ogt, %587, %593 : vector<8x128xf32>
    %595 = arith.cmpf oge, %587, %192 : vector<8x128xf32>
    %596 = arith.ori %595, %594 : vector<8x128xi1>
    %597 = arith.andi %539, %596 : vector<8x128xi1>
    %598 = arith.select %597, %580, %546 : vector<8x128xi1>, vector<8x128xf32>
    %599 = arith.select %597, %580, %548 : vector<8x128xi1>, vector<8x128xf32>
    %cst_110 = arith.constant dense<true> : vector<8x128xi1>
    %600 = arith.xori %597, %cst_110 : vector<8x128xi1>
    %601 = arith.andi %539, %600 : vector<8x128xi1>
    %602 = math.absf %589 : vector<8x128xf32>
    %cst_111 = arith.constant 0.000000e+00 : f32
    %cst_112 = arith.constant 0.899999976 : f32
    %603 = arith.subf %cst_111, %cst_112 : f32
    %604 = vector.broadcast %603 : f32 to vector<8x128xf32>
    %605 = arith.mulf %604, %2 : vector<8x128xf32>
    %606 = arith.cmpf ole, %602, %605 : vector<8x128xf32>
    %607 = arith.andi %601, %606 : vector<8x128xi1>
    %608 = arith.select %607, %580, %598 : vector<8x128xi1>, vector<8x128xf32>
    %609 = arith.select %607, %580, %599 : vector<8x128xi1>, vector<8x128xf32>
    %cst_113 = arith.constant dense<true> : vector<8x128xi1>
    %610 = arith.xori %607, %cst_113 : vector<8x128xi1>
    %611 = arith.andi %539, %610 : vector<8x128xi1>
    %612 = arith.subf %608, %551 : vector<8x128xf32>
    %613 = arith.mulf %589, %612 : vector<8x128xf32>
    %cst_114 = arith.constant 0.000000e+00 : f32
    %614 = vector.broadcast %cst_114 : f32 to vector<8x128xf32>
    %615 = arith.cmpf oge, %613, %614 : vector<8x128xf32>
    %616 = arith.andi %615, %611 : vector<8x128xi1>
    %617 = arith.andi %601, %616 : vector<8x128xi1>
    %618 = arith.select %617, %551, %608 : vector<8x128xi1>, vector<8x128xf32>
    %619 = arith.select %617, %552, %609 : vector<8x128xi1>, vector<8x128xf32>
    %620 = tpu.concatenate %618, %619 in 0 : vector<8x128xf32>, vector<8x128xf32> -> vector<16x128xf32>
    %c0_115 = arith.constant 0 : index
    %c0_116 = arith.constant 0 : index
    %621 = vector.load %arg2[%c0_115, %c0_116] : memref<16x128xf32, #tpu.memory_space<vmem>>, vector<16x128xf32>
    tpu.vector_store %arg2[%c0_115, %c0_116], %620 {strides = array<i32>} : memref<16x128xf32, #tpu.memory_space<vmem>>, vector<16x128xf32>,
    return
  }
  func.func @transform_0(%arg0: i32) -> (i32, i32) {
    %c0_i32 = arith.constant 0 : i32
    %c0_i32_0 = arith.constant 0 : i32
    return %c0_i32, %arg0 : i32, i32
  }
  func.func @transform_1(%arg0: i32) -> (i32, i32) {
    %c0_i32 = arith.constant 0 : i32
    %c0_i32_0 = arith.constant 0 : i32
    return %c0_i32, %arg0 : i32, i32
  }
}

</mosaic_0001>

<llo_original>
// kernel: tpu_custom_call.1
$region0: #{tpu_custom_call.1}
  #allocation0 [shape = 'u32[]', space=smem, size = 0x4, offset = 0x4, fixed_abs, tag = 'smem constant byte address 0x4 - core index']
  #allocation1 [shape = 'u32[144,128]{1,0:T(1,128)}', space=vmem, size = 0x12000, scoped, tag = 'internal scratch']
  %s0 = inlined_call_operand.hbm [shape: f32[24,128], index: 0, kind: input, shape index: {}]
  %s1 = inlined_call_operand.hbm [shape: f32[16,128], index: 1, kind: output, shape index: {}]
  %s2 = sld [smem:[#allocation0]]
  $region18: #{tpu_custom_call.1} parent=0
    _
  %s4 = ssub.s32 1, %s2
  %s5 = scalar_select 0, %s4, %s2
  $region1: #{tpu_custom_call.1} parent=0
    #allocation2 [shape = 'u8[12288]{0}', space=vmem, size = 0x3000, scoped, tag = 'input window, operand 0, single buffered']
    #allocation3 [shape = 's32[1]{0}', space=sflag, size = 0x4, scoped, tag = 'scoped memory for tpu_custom_call.1']
    #allocation4 [shape = 's32[1]{0}', space=sflag, size = 0x4, scoped, tag = 'scoped memory for tpu_custom_call.1']
    #allocation5 [shape = 'u8[8192]{0}', space=vmem, size = 0x2000, scoped, tag = 'output window, operand 0, single buffered']
    %6 = vsyncpa [#allocation3], 0
    %7 = vsyncpa [#allocation4], 0
    // Predicated region
    $region2: #{tpu_custom_call.1} parent=1 // pred_check
      _
    $region3: #{tpu_custom_call.1} parent=1 // pred_check_branch
      %9 = sbr.rel (0) target = $region5
    $region4: #{tpu_custom_call.1} parent=1 // pred_region
      %s11 = ssub.s32 384, 384
      %12 = vsyncadd [#allocation3], %s11
      %s13 = sshll.u32 [#allocation2], 4
      %s14 = int_to_ptr.vmem [resolvable:$true] %s13
      %19 = dma.hbm_to_vmem [thread:$0]  %s0, 384, %s14, [#allocation3], 128, 128, 8
    $region5: #{tpu_custom_call.1} parent=1 // pred_fallthru
      _
    // Predicated region
    $region6: #{tpu_custom_call.1} parent=1 // pred_check
      _
    $region7: #{tpu_custom_call.1} parent=1 // pred_check_branch
      %21 = sbr.rel (0) target = $region9
    $region8: #{tpu_custom_call.1} parent=1 // pred_region
      %22 = dma.done [#allocation3], 384
    $region9: #{tpu_custom_call.1} parent=1 // pred_fallthru
      _
    %v23 = vld [vmem:[#allocation2] sm:$0xff]
    %v24 = vld [vmem:[#allocation2 + $0x8] sm:$0xff]
    %v25 = vld [vmem:[#allocation2 + $0x10] sm:$0xff]
    %v26 = vadd.f32 %v23, %v24
    %v27 = vmul.f32 %v25, 0.5
    %v28 = vadd.f32 %v26, %v27
    %v29 = vadd.f32 %v24, %v25
    %v30 = vmul.f32 %v24, 0.0001
    %v31 = vadd.f32 %v23, %v30
    %vm32 = vcmp.gt.f32.partialorder %v28, %v31
    %vm33 = vmxor %vm32, 1
    %v34 = vand.u32 2147483647, %v29
    %v35 = vmul.f32 %v24, -0.9
    %vm36 = vcmp.le.f32.partialorder %v34, %v35
    %vm37 = vmxor %vm36, 1
    %vm38 = vmand %vm33, %vm37
    %vm39 = vcmp.ge.f32.partialorder %v29, 0.0
    %vm40 = vmand %vm38, %vm39
    %vm41 = vmor %vm32, %vm40
    %v42 = vsel %vm40, 0.0, 1.0
    %v43 = vsel %vm40, 1.0, 0.0
    %vm44 = vmxor %vm40, 1
    %vm45 = vmand %vm38, %vm44
    %v46 = vsel %vm45, %v42, %v43
    %v47 = vmul.f32 %v42, 2.0
    %v48 = vmin.f32 %v47, 8.0
    %v49 = vsel %vm45, %v48, %v42
    %v50 = vmul.f32 %v49, %v24
    %v51 = vadd.f32 %v23, %v50
    %v52 = vmul.f32 %v49, %v49
    %v53 = vmul.f32 %v52, 0.5
    %v54 = vmul.f32 %v53, %v25
    %v55 = vadd.f32 %v51, %v54
    %v56 = vmul.f32 %v49, %v25
    %v57 = vadd.f32 %v24, %v56
    %v58 = vmul.f32 %v49, 0.0001
    %v59 = vmul.f32 %v58, %v24
    %v60 = vadd.f32 %v23, %v59
    %vm61 = vcmp.gt.f32.partialorder %v55, %v60
    %vm62 = vcmp.ge.f32.partialorder %v55, %v28
    %vm63 = vmor %vm61, %vm62
    %vm64 = vmand %vm45, %vm63
    %vm65 = vmor %vm41, %vm64
    %vm66 = vmxor %vm64, 1
    %vm67 = vmand %vm45, %vm66
    %v68 = vand.u32 2147483647, %v57
    %vm69 = vcmp.le.f32.partialorder %v68, %v35
    %vm70 = vmxor %vm69, 1
    %vm71 = vmand %vm67, %vm70
    %vm72 = vcmp.ge.f32.partialorder %v57, 0.0
    %vm73 = vmand %vm71, %vm72
    %vm74 = vmor %vm65, %vm73
    %v75 = vsel %vm73, %v46, %v49
    %v76 = vsel %vm73, %v49, %v46
    %vm77 = vmxor %vm73, 1
    %vm78 = vmand %vm71, %vm77
    %v79 = vsel %vm78, %v75, %v76
    %v80 = vmul.f32 %v75, 2.0
    %v81 = vmin.f32 %v80, 8.0
    %v82 = vsel %vm78, %v81, %v75
    %v83 = vmul.f32 %v82, %v24
    %v84 = vadd.f32 %v23, %v83
    %v85 = vmul.f32 %v82, %v82
    %v86 = vmul.f32 %v85, 0.5
    %v87 = vmul.f32 %v86, %v25
    %v88 = vadd.f32 %v84, %v87
    %v89 = vmul.f32 %v82, %v25
    %v90 = vadd.f32 %v24, %v89
    %v91 = vmul.f32 %v82, 0.0001
    %v92 = vmul.f32 %v91, %v24
    %v93 = vadd.f32 %v23, %v92
    %vm94 = vcmp.gt.f32.partialorder %v88, %v93
    %vm95 = vcmp.ge.f32.partialorder %v88, %v55
    %vm96 = vmor %vm94, %vm95
    %vm97 = vmand %vm78, %vm96
    %vm98 = vmor %vm74, %vm97
    %vm99 = vmxor %vm97, 1
    %vm100 = vmand %vm78, %vm99
    %v101 = vand.u32 2147483647, %v90
    %vm102 = vcmp.le.f32.partialorder %v101, %v35
    %vm103 = vmxor %vm102, 1
    %vm104 = vmand %vm100, %vm103
    %vm105 = vcmp.ge.f32.partialorder %v90, 0.0
    %vm106 = vmand %vm104, %vm105
    %vm107 = vmor %vm98, %vm106
    %v108 = vsel %vm106, %v79, %v82
    %v109 = vsel %vm106, %v82, %v79
    %vm110 = vmxor %vm106, 1
    %vm111 = vmand %vm104, %vm110
    %v112 = vsel %vm111, %v108, %v109
    %v113 = vmul.f32 %v108, 2.0
    %v114 = vmin.f32 %v113, 8.0
    %v115 = vsel %vm111, %v114, %v108
    %v116 = vmul.f32 %v115, %v24
    %v117 = vadd.f32 %v23, %v116
    %v118 = vmul.f32 %v115, %v115
    %v119 = vmul.f32 %v118, 0.5
    %v120 = vmul.f32 %v119, %v25
    %v121 = vadd.f32 %v117, %v120
    %v122 = vmul.f32 %v115, %v25
    %v123 = vadd.f32 %v24, %v122
    %v124 = vmul.f32 %v115, 0.0001
    %v125 = vmul.f32 %v124, %v24
    %v126 = vadd.f32 %v23, %v125
    %vm127 = vcmp.gt.f32.partialorder %v121, %v126
    %vm128 = vcmp.ge.f32.partialorder %v121, %v88
    %vm129 = vmor %vm127, %vm128
    %vm130 = vmand %vm111, %vm129
    %vm131 = vmor %vm107, %vm130
    %vm132 = vmxor %vm130, 1
    %vm133 = vmand %vm111, %vm132
    %v134 = vand.u32 2147483647, %v123
    %vm135 = vcmp.le.f32.partialorder %v134, %v35
    %vm136 = vmxor %vm135, 1
    %vm137 = vmand %vm133, %vm136
    %vm138 = vcmp.ge.f32.partialorder %v123, 0.0
    %vm139 = vmand %vm137, %vm138
    %vm140 = vmor %vm131, %vm139
    %v141 = vsel %vm139, %v112, %v115
    %v142 = vsel %vm139, %v115, %v112
    %vm143 = vmxor %vm139, 1
    %vm144 = vmand %vm137, %vm143
    %v145 = vsel %vm144, %v141, %v142
    %v146 = vmul.f32 %v141, 2.0
    %v147 = vmin.f32 %v146, 8.0
    %v148 = vsel %vm144, %v147, %v141
    %v149 = vmul.f32 %v145, %v24
    %v150 = vadd.f32 %v23, %v149
    %v151 = vmul.f32 %v145, %v145
    %v152 = vmul.f32 %v151, 0.5
    %v153 = vmul.f32 %v152, %v25
    %v154 = vadd.f32 %v150, %v153
    %v155 = vmul.f32 %v145, %v25
    %v156 = vadd.f32 %v24, %v155
    %v157 = vmul.f32 %v141, %v25
    %v158 = vadd.f32 %v24, %v157
    %v159 = vsub.f32 %v158, %v156
    %v160 = vadd.f32 %v159, 1e-08
    %vm161 = vcmp.eq.f32.partialorder %v160, 0.0
    %v162 = vsel %vm161, 1e-12, %v160
    %v163 = vsub.f32 %v148, %v145
    %v164 = vmul.f32 %v156, %v163
    %v165 = vrcp.pop %v162
    %v166 = vmul.f32 %v164, %v165
    %v167 = vsub.f32 %v145, %v166
    %vm168 = vcmp.eq.f32.partialorder %v159, 0.0
    %v169 = vmin.f32 %v145, %v148
    %vm170 = vcmp.lt.f32.partialorder %v167, %v169
    %v171 = vmax.f32 %v145, %v148
    %vm172 = vcmp.gt.f32.partialorder %v167, %v171
    %vm173 = vmor %vm170, %vm172
    %vm174 = vmor %vm168, %vm173
    %v175 = vadd.f32 %v145, %v148
    %v176 = vmul.f32 %v175, 0.5
    %v177 = vsel %vm174, %v176, %v167
    %v178 = vsel %vm140, %v177, 0.0
    %v179 = vmul.f32 %v178, %v24
    %v180 = vadd.f32 %v23, %v179
    %v181 = vmul.f32 %v178, %v178
    %v182 = vmul.f32 %v181, 0.5
    %v183 = vmul.f32 %v182, %v25
    %v184 = vadd.f32 %v180, %v183
    %v185 = vmul.f32 %v178, %v25
    %v186 = vadd.f32 %v24, %v185
    %v187 = vmul.f32 %v178, 0.0001
    %v188 = vmul.f32 %v187, %v24
    %v189 = vadd.f32 %v23, %v188
    %vm190 = vcmp.gt.f32.partialorder %v184, %v189
    %vm191 = vcmp.ge.f32.partialorder %v184, %v154
    %vm192 = vmor %vm191, %vm190
    %vm193 = vmand %vm140, %vm192
    %v194 = vsel %vm193, %v178, %v148
    %v195 = vsel %vm193, %v178, %v141
    %vm196 = vmxor %vm193, 1
    %vm197 = vmand %vm140, %vm196
    %v198 = vand.u32 2147483647, %v186
    %vm199 = vcmp.le.f32.partialorder %v198, %v35
    %vm200 = vmand %vm197, %vm199
    %v201 = vsel %vm200, %v178, %v194
    %v202 = vsel %vm200, %v178, %v195
    %vm203 = vmxor %vm200, 1
    %vm204 = vmand %vm140, %vm203
    %v205 = vsub.f32 %v201, %v145
    %v206 = vmul.f32 %v186, %v205
    %vm207 = vcmp.ge.f32.partialorder %v206, 0.0
    %vm208 = vmand %vm207, %vm204
    %vm209 = vmand %vm197, %vm208
    %v210 = vsel %vm209, %v145, %v201
    %v211 = vsel %vm209, %v201, %v145
    %v212 = vsel %vm209, %v145, %v202
    %v213 = vsel %vm209, %v202, %v145
    %vm214 = vmand %vm197, %vm204
    %v215 = vsel %vm214, %v178, %v211
    %v216 = vsel %vm214, %v178, %v213
    %v217 = vmul.f32 %v216, %v25
    %v218 = vadd.f32 %v24, %v217
    %v219 = vmul.f32 %v212, %v25
    %v220 = vadd.f32 %v24, %v219
    %v221 = vsub.f32 %v220, %v218
    %v222 = vadd.f32 %v221, 1e-08
    %vm223 = vcmp.eq.f32.partialorder %v222, 0.0
    %v224 = vsel %vm223, 1e-12, %v222
    %v225 = vsub.f32 %v210, %v215
    %v226 = vmul.f32 %v218, %v225
    %v227 = vrcp.pop %v224
    %v228 = vmul.f32 %v226, %v227
    %v229 = vsub.f32 %v215, %v228
    %vm230 = vcmp.eq.f32.partialorder %v221, 0.0
    %v231 = vmin.f32 %v215, %v210
    %vm232 = vcmp.lt.f32.partialorder %v229, %v231
    %v233 = vmax.f32 %v215, %v210
    %vm234 = vcmp.gt.f32.partialorder %v229, %v233
    %vm235 = vmor %vm232, %vm234
    %vm236 = vmor %vm230, %vm235
    %v237 = vadd.f32 %v215, %v210
    %v238 = vmul.f32 %v237, 0.5
    %v239 = vsel %vm236, %v238, %v229
    %v240 = vsel %vm204, %v239, 0.0
    %v241 = vmul.f32 %v240, %v24
    %v242 = vadd.f32 %v23, %v241
    %v243 = vmul.f32 %v240, %v240
    %v244 = vmul.f32 %v243, 0.5
    %v245 = vmul.f32 %v244, %v25
    %v246 = vadd.f32 %v242, %v245
    %v247 = vmul.f32 %v240, %v25
    %v248 = vadd.f32 %v24, %v247
    %v249 = vmul.f32 %v240, 0.0001
    %v250 = vmul.f32 %v249, %v24
    %v251 = vadd.f32 %v23, %v250
    %vm252 = vcmp.gt.f32.partialorder %v246, %v251
    %vm253 = vcmp.ge.f32.partialorder %v246, %v154
    %vm254 = vmor %vm253, %vm252
    %vm255 = vmand %vm204, %vm254
    %v256 = vsel %vm255, %v240, %v210
    %v257 = vsel %vm255, %v240, %v212
    %vm258 = vmxor %vm255, 1
    %vm259 = vmand %vm204, %vm258
    %v260 = vand.u32 2147483647, %v248
    %vm261 = vcmp.le.f32.partialorder %v260, %v35
    %vm262 = vmand %vm259, %vm261
    %v263 = vsel %vm262, %v240, %v256
    %v264 = vsel %vm262, %v240, %v257
    %vm265 = vmxor %vm262, 1
    %vm266 = vmand %vm204, %vm265
    %v267 = vsub.f32 %v263, %v215
    %v268 = vmul.f32 %v248, %v267
    %vm269 = vcmp.ge.f32.partialorder %v268, 0.0
    %vm270 = vmand %vm269, %vm266
    %vm271 = vmand %vm259, %vm270
    %v272 = vsel %vm271, %v215, %v263
    %v273 = vsel %vm271, %v263, %v215
    %v274 = vsel %vm271, %v216, %v264
    %v275 = vsel %vm271, %v264, %v216
    %vm276 = vmand %vm259, %vm266
    %v277 = vsel %vm276, %v240, %v273
    %v278 = vsel %vm276, %v240, %v275
    %v279 = vmul.f32 %v278, %v25
    %v280 = vadd.f32 %v24, %v279
    %v281 = vmul.f32 %v274, %v25
    %v282 = vadd.f32 %v24, %v281
    %v283 = vsub.f32 %v282, %v280
    %v284 = vadd.f32 %v283, 1e-08
    %vm285 = vcmp.eq.f32.partialorder %v284, 0.0
    %v286 = vsel %vm285, 1e-12, %v284
    %v287 = vsub.f32 %v272, %v277
    %v288 = vmul.f32 %v280, %v287
    %v289 = vrcp.pop %v286
    %v290 = vmul.f32 %v288, %v289
    %v291 = vsub.f32 %v277, %v290
    %vm292 = vcmp.eq.f32.partialorder %v283, 0.0
    %v293 = vmin.f32 %v277, %v272
    %vm294 = vcmp.lt.f32.partialorder %v291, %v293
    %v295 = vmax.f32 %v277, %v272
    %vm296 = vcmp.gt.f32.partialorder %v291, %v295
    %vm297 = vmor %vm294, %vm296
    %vm298 = vmor %vm292, %vm297
    %v299 = vadd.f32 %v277, %v272
    %v300 = vmul.f32 %v299, 0.5
    %v301 = vsel %vm298, %v300, %v291
    %v302 = vsel %vm266, %v301, 0.0
    %v303 = vmul.f32 %v302, %v24
    %v304 = vadd.f32 %v23, %v303
    %v305 = vmul.f32 %v302, %v302
    %v306 = vmul.f32 %v305, 0.5
    %v307 = vmul.f32 %v306, %v25
    %v308 = vadd.f32 %v304, %v307
    %v309 = vmul.f32 %v302, %v25
    %v310 = vadd.f32 %v24, %v309
    %v311 = vmul.f32 %v302, 0.0001
    %v312 = vmul.f32 %v311, %v24
    %v313 = vadd.f32 %v23, %v312
    %vm314 = vcmp.gt.f32.partialorder %v308, %v313
    %vm315 = vcmp.ge.f32.partialorder %v308, %v154
    %vm316 = vmor %vm315, %vm314
    %vm317 = vmand %vm266, %vm316
    %v318 = vsel %vm317, %v302, %v272
    %v319 = vsel %vm317, %v302, %v274
    %vm320 = vmxor %vm317, 1
    %vm321 = vmand %vm266, %vm320
    %v322 = vand.u32 2147483647, %v310
    %vm323 = vcmp.le.f32.partialorder %v322, %v35
    %vm324 = vmand %vm321, %vm323
    %v325 = vsel %vm324, %v302, %v318
    %v326 = vsel %vm324, %v302, %v319
    %vm327 = vmxor %vm324, 1
    %vm328 = vmand %vm266, %vm327
    %v329 = vsub.f32 %v325, %v277
    %v330 = vmul.f32 %v310, %v329
    %vm331 = vcmp.ge.f32.partialorder %v330, 0.0
    %vm332 = vmand %vm331, %vm328
    %vm333 = vmand %vm321, %vm332
    %v334 = vsel %vm333, %v277, %v325
    %v335 = vsel %vm333, %v325, %v277
    %v336 = vsel %vm333, %v278, %v326
    %v337 = vsel %vm333, %v326, %v278
    %vm338 = vmand %vm321, %vm328
    %v339 = vsel %vm338, %v302, %v335
    %v340 = vsel %vm338, %v302, %v337
    %v341 = vmul.f32 %v340, %v25
    %v342 = vadd.f32 %v24, %v341
    %v343 = vmul.f32 %v336, %v25
    %v344 = vadd.f32 %v24, %v343
    %v345 = vsub.f32 %v344, %v342
    %v346 = vadd.f32 %v345, 1e-08
    %vm347 = vcmp.eq.f32.partialorder %v346, 0.0
    %v348 = vsel %vm347, 1e-12, %v346
    %v349 = vsub.f32 %v334, %v339
    %v350 = vmul.f32 %v342, %v349
    %v351 = vrcp.pop %v348
    %v352 = vmul.f32 %v350, %v351
    %v353 = vsub.f32 %v339, %v352
    %vm354 = vcmp.eq.f32.partialorder %v345, 0.0
    %v355 = vmin.f32 %v339, %v334
    %vm356 = vcmp.lt.f32.partialorder %v353, %v355
    %v357 = vmax.f32 %v339, %v334
    %vm358 = vcmp.gt.f32.partialorder %v353, %v357
    %vm359 = vmor %vm356, %vm358
    %vm360 = vmor %vm354, %vm359
    %v361 = vadd.f32 %v339, %v334
    %v362 = vmul.f32 %v361, 0.5
    %v363 = vsel %vm360, %v362, %v353
    %v364 = vsel %vm328, %v363, 0.0
    %v365 = vmul.f32 %v364, %v24
    %v366 = vadd.f32 %v23, %v365
    %v367 = vmul.f32 %v364, %v364
    %v368 = vmul.f32 %v367, 0.5
    %v369 = vmul.f32 %v368, %v25
    %v370 = vadd.f32 %v366, %v369
    %v371 = vmul.f32 %v364, %v25
    %v372 = vadd.f32 %v24, %v371
    %v373 = vmul.f32 %v364, 0.0001
    %v374 = vmul.f32 %v373, %v24
    %v375 = vadd.f32 %v23, %v374
    %vm376 = vcmp.gt.f32.partialorder %v370, %v375
    %vm377 = vcmp.ge.f32.partialorder %v370, %v154
    %vm378 = vmor %vm377, %vm376
    %vm379 = vmand %vm328, %vm378
    %v380 = vsel %vm379, %v364, %v334
    %v381 = vsel %vm379, %v364, %v336
    %vm382 = vmxor %vm379, 1
    %vm383 = vmand %vm328, %vm382
    %v384 = vand.u32 2147483647, %v372
    %vm385 = vcmp.le.f32.partialorder %v384, %v35
    %vm386 = vmand %vm383, %vm385
    %v387 = vsel %vm386, %v364, %v380
    %v388 = vsel %vm386, %v364, %v381
    %vm389 = vmxor %vm386, 1
    %vm390 = vmand %vm328, %vm389
    %v391 = vsub.f32 %v387, %v339
    %v392 = vmul.f32 %v372, %v391
    %vm393 = vcmp.ge.f32.partialorder %v392, 0.0
    %vm394 = vmand %vm393, %vm390
    %vm395 = vmand %vm383, %vm394
    %v396 = vsel %vm395, %v339, %v387
    %v397 = vsel %vm395, %v387, %v339
    %v398 = vsel %vm395, %v340, %v388
    %v399 = vsel %vm395, %v388, %v340
    %vm400 = vmand %vm383, %vm390
    %v401 = vsel %vm400, %v364, %v397
    %v402 = vsel %vm400, %v364, %v399
    %v403 = vmul.f32 %v402, %v25
    %v404 = vadd.f32 %v24, %v403
    %v405 = vmul.f32 %v398, %v25
    %v406 = vadd.f32 %v24, %v405
    %v407 = vsub.f32 %v406, %v404
    %v408 = vadd.f32 %v407, 1e-08
    %vm409 = vcmp.eq.f32.partialorder %v408, 0.0
    %v410 = vsel %vm409, 1e-12, %v408
    %v411 = vsub.f32 %v396, %v401
    %v412 = vmul.f32 %v404, %v411
    %v413 = vrcp.pop %v410
    %v414 = vmul.f32 %v412, %v413
    %v415 = vsub.f32 %v401, %v414
    %vm416 = vcmp.eq.f32.partialorder %v407, 0.0
    %v417 = vmin.f32 %v401, %v396
    %vm418 = vcmp.lt.f32.partialorder %v415, %v417
    %v419 = vmax.f32 %v401, %v396
    %vm420 = vcmp.gt.f32.partialorder %v415, %v419
    %vm421 = vmor %vm418, %vm420
    %vm422 = vmor %vm416, %vm421
    %v423 = vadd.f32 %v401, %v396
    %v424 = vmul.f32 %v423, 0.5
    %v425 = vsel %vm422, %v424, %v415
    %v426 = vsel %vm390, %v425, 0.0
    %v427 = vmul.f32 %v426, %v24
    %v428 = vadd.f32 %v23, %v427
    %v429 = vmul.f32 %v426, %v426
    %v430 = vmul.f32 %v429, 0.5
    %v431 = vmul.f32 %v430, %v25
    %v432 = vadd.f32 %v428, %v431
    %v433 = vmul.f32 %v426, %v25
    %v434 = vadd.f32 %v24, %v433
    %v435 = vmul.f32 %v426, 0.0001
    %v436 = vmul.f32 %v435, %v24
    %v437 = vadd.f32 %v23, %v436
    %vm438 = vcmp.gt.f32.partialorder %v432, %v437
    %vm439 = vcmp.ge.f32.partialorder %v432, %v154
    %vm440 = vmor %vm439, %vm438
    %vm441 = vmand %vm390, %vm440
    %v442 = vsel %vm441, %v426, %v396
    %v443 = vsel %vm441, %v426, %v398
    %vm444 = vmxor %vm441, 1
    %vm445 = vmand %vm390, %vm444
    %v446 = vand.u32 2147483647, %v434
    %vm447 = vcmp.le.f32.partialorder %v446, %v35
    %vm448 = vmand %vm445, %vm447
    %v449 = vsel %vm448, %v426, %v442
    %v450 = vsel %vm448, %v426, %v443
    %vm451 = vmxor %vm448, 1
    %vm452 = vmand %vm390, %vm451
    %v453 = vsub.f32 %v449, %v401
    %v454 = vmul.f32 %v434, %v453
    %vm455 = vcmp.ge.f32.partialorder %v454, 0.0
    %vm456 = vmand %vm455, %vm452
    %vm457 = vmand %vm445, %vm456
    %v458 = vsel %vm457, %v401, %v449
    %v459 = vsel %vm457, %v449, %v401
    %v460 = vsel %vm457, %v402, %v450
    %v461 = vsel %vm457, %v450, %v402
    %vm462 = vmand %vm445, %vm452
    %v463 = vsel %vm462, %v426, %v459
    %v464 = vsel %vm462, %v426, %v461
    %v465 = vmul.f32 %v464, %v25
    %v466 = vadd.f32 %v24, %v465
    %v467 = vmul.f32 %v460, %v25
    %v468 = vadd.f32 %v24, %v467
    %v469 = vsub.f32 %v468, %v466
    %v470 = vadd.f32 %v469, 1e-08
    %vm471 = vcmp.eq.f32.partialorder %v470, 0.0
    %v472 = vsel %vm471, 1e-12, %v470
    %v473 = vsub.f32 %v458, %v463
    %v474 = vmul.f32 %v466, %v473
    %v475 = vrcp.pop %v472
    %v476 = vmul.f32 %v474, %v475
    %v477 = vsub.f32 %v463, %v476
    %vm478 = vcmp.eq.f32.partialorder %v469, 0.0
    %v479 = vmin.f32 %v463, %v458
    %vm480 = vcmp.lt.f32.partialorder %v477, %v479
    %v481 = vmax.f32 %v463, %v458
    %vm482 = vcmp.gt.f32.partialorder %v477, %v481
    %vm483 = vmor %vm480, %vm482
    %vm484 = vmor %vm478, %vm483
    %v485 = vadd.f32 %v463, %v458
    %v486 = vmul.f32 %v485, 0.5
    %v487 = vsel %vm484, %v486, %v477
    %v488 = vsel %vm452, %v487, 0.0
    %v489 = vmul.f32 %v488, %v24
    %v490 = vadd.f32 %v23, %v489
    %v491 = vmul.f32 %v488, %v488
    %v492 = vmul.f32 %v491, 0.5
    %v493 = vmul.f32 %v492, %v25
    %v494 = vadd.f32 %v490, %v493
    %v495 = vmul.f32 %v488, %v25
    %v496 = vadd.f32 %v24, %v495
    %v497 = vmul.f32 %v488, 0.0001
    %v498 = vmul.f32 %v497, %v24
    %v499 = vadd.f32 %v23, %v498
    %vm500 = vcmp.gt.f32.partialorder %v494, %v499
    %vm501 = vcmp.ge.f32.partialorder %v494, %v154
    %vm502 = vmor %vm501, %vm500
    %vm503 = vmand %vm452, %vm502
    %v504 = vsel %vm503, %v488, %v458
    %v505 = vsel %vm503, %v488, %v460
    %vm506 = vmxor %vm503, 1
    %vm507 = vmand %vm452, %vm506
    %v508 = vand.u32 2147483647, %v496
    %vm509 = vcmp.le.f32.partialorder %v508, %v35
    %vm510 = vmand %vm507, %vm509
    %v511 = vsel %vm510, %v488, %v504
    %v512 = vsel %vm510, %v488, %v505
    %vm513 = vmxor %vm510, 1
    %vm514 = vmand %vm452, %vm513
    %v515 = vsub.f32 %v511, %v463
    %v516 = vmul.f32 %v496, %v515
    %vm517 = vcmp.ge.f32.partialorder %v516, 0.0
    %vm518 = vmand %vm517, %vm514
    %vm519 = vmand %vm507, %vm518
    %v520 = vsel %vm519, %v463, %v511
    %v521 = vsel %vm519, %v464, %v512
    %522 = vst [vmem:[#allocation5] sm:$0xff] %v520
    %523 = vst [vmem:[#allocation5 + $0x8] sm:$0xff] %v521
    // Predicated region
    $region10: #{tpu_custom_call.1} parent=1 // pred_check
      _
    $region11: #{tpu_custom_call.1} parent=1 // pred_check_branch
      %525 = sbr.rel (0) target = $region13
    $region12: #{tpu_custom_call.1} parent=1 // pred_region
      %s527 = ssub.s32 256, 256
      %528 = vsyncadd [#allocation4], %s527
      %s529 = sshll.u32 [#allocation5], 4
      %s530 = int_to_ptr.vmem [resolvable:$true] %s529
      %535 = dma.vmem_to_hbm [thread:$0]  %s530, 256, %s1, [#allocation4], 128, 128, 8
    $region13: #{tpu_custom_call.1} parent=1 // pred_fallthru
      _
    // Predicated region
    $region14: #{tpu_custom_call.1} parent=1 // pred_check
      _
    $region15: #{tpu_custom_call.1} parent=1 // pred_check_branch
      %537 = sbr.rel (0) target = $region17
    $region16: #{tpu_custom_call.1} parent=1 // pred_region
      %538 = dma.done [#allocation4], 256
    $region17: #{tpu_custom_call.1} parent=1 // pred_fallthru
      _
    %539 = vsyncpa [#allocation3], 1
    %540 = vsyncpa [#allocation4], 1

</llo_original>
